<compile_context>
chip_gen: v7x
topology: tpu7x:2x2x1
jax: 0.10.0
libtpu: 0.0.40
codegen_flags: <defaults>
</compile_context>

<pallas_src>
import functools

import jax
import jax.numpy as jnp
import numpy as np
from jax import lax
from jax.experimental import pallas as pl
from jax.experimental.pallas import tpu as pltpu

CUTOFF = 9.0
UNIT_CONVERSION = 1.0 / 0.001987191 * 1.380649e-23
VIRIAL_CONST = 6.946704300182635e-24

# Square pair-block tile (atoms); lane multiple, clipped to divide n_pad.
# tile_i == tile_j lets the diagonal block use a purely local triangle mask.
# Sweep {128, 256} per generation if the store slot becomes co-limiting.
TILE = 128


def _pressure_kernel(params_ref, mass_ref, v_ref, q_ref, qsub_ref, cut_ref,
                     out_ref, *, n_pad, tile, ke_only):
    # params_ref (SMEM f32[13]):
    #   [Lx,Ly,Lz, Lx/2,Ly/2,Lz/2, 1/Lx,1/Ly,1/Lz, ke_scale, vir_scale,
    #    sigma^2, 24*eps]
    ke_scale = params_ref[9]

    m = mass_ref[...]                  # (1, n_pad), zero for padded atoms
    vx = v_ref[0, 0:1, :]              # (1, n_pad)
    vy = v_ref[0, 1:2, :]
    vz = v_ref[0, 2:3, :]

    # Kinetic part; only the first i-block of each frame credits it (so the
    # wrapper-side sum over i-blocks counts it exactly once).
    kef = jnp.where(pl.program_id(1) == 0, 1.0, 0.0)
    p_xy = kef * jnp.sum(vx * vy * m) * ke_scale
    p_xz = kef * jnp.sum(vx * vz * m) * ke_scale
    p_yz = kef * jnp.sum(vy * vz * m) * ke_scale

    if not ke_only:
        Lx, Ly, Lz = params_ref[0], params_ref[1], params_ref[2]
        hLx, hLy, hLz = params_ref[3], params_ref[4], params_ref[5]
        iLx, iLy, iLz = params_ref[6], params_ref[7], params_ref[8]
        vir_scale = params_ref[10]
        sig2 = params_ref[11]
        eps24 = params_ref[12]

        bi = pl.program_id(1)              # this grid step's i-block
        num_j = n_pad // tile              # == cdiv(n_real, tile): the padded
                                           # tail never adds a whole block, so
                                           # no fully-padded column block exists

        # i-block position columns straight from the sublane-layout input
        # (no in-kernel transpose / eye-masked reduce).
        qx_i = qsub_ref[0, :, 0:1]         # (tile, 1)
        qy_i = qsub_ref[0, :, 1:2]
        qz_i = qsub_ref[0, :, 2:3]

        def mimage(q_row, q_col, L, hL, iL):
            d = q_row - q_col              # d[i, j] = q[j] - q[i]
            return d - jnp.floor((d + hL) * iL) * L

        def block_contrib(j0, diag):
            qj = q_ref[0, :, pl.ds(j0, tile)]        # (3, tile)
            cut_j = cut_ref[0:1, pl.ds(j0, tile)]    # (1, tile)
            dx = mimage(qj[0:1, :], qx_i, Lx, hLx, iLx)
            dy = mimage(qj[1:2, :], qy_i, Ly, hLy, iLy)
            dz = mimage(qj[2:3, :], qz_i, Lz, hLz, iLz)
            sq = dx * dx + dy * dy + dz * dz
            # cut_j is -1 for padded columns -> they always fail the compare;
            # sq != 0 mirrors torch's `squared_displacement != 0`.
            mask = (sq < cut_j) & (sq != 0.0)
            if diag:
                # Only the diagonal block needs the strict upper triangle;
                # tile_i == tile_j and j0 == i0, so local iotas suffice.
                row_l = lax.broadcasted_iota(jnp.int32, (tile, tile), 0)
                col_l = lax.broadcasted_iota(jnp.int32, (tile, tile), 1)
                mask = mask & (col_l > row_l)
            # |F|/r = 24*eps*(2*(s/r)^12 - (s/r)^6) / r^2  (no sqrt, no divide)
            rinv = pl.reciprocal(sq, approx=True)    # EUP slot
            rinv = rinv * (2.0 - sq * rinv)          # one Newton step
            sr2 = sig2 * rinv
            sr6 = sr2 * sr2 * sr2
            coef = jnp.where(mask, eps24 * (2.0 * sr6 * sr6 - sr6) * rinv, 0.0)
            cdx = dx * coef
            cdy = dy * coef
            # Partial sublane reduce only; (1, tile) vectors are the carries.
            return (jnp.sum(cdx * dy, axis=0, keepdims=True),
                    jnp.sum(cdx * dz, axis=0, keepdims=True),
                    jnp.sum(cdy * dz, axis=0, keepdims=True))

        # Diagonal block once, outside the loop.
        acc = block_contrib(pl.multiple_of(bi * tile, 128), diag=True)

        # Strictly-above-diagonal blocks only (below-diagonal blocks skipped).
        def j_body(bj, acc):
            cxy, cxz, cyz = block_contrib(pl.multiple_of(bj * tile, 128),
                                          diag=False)
            return (acc[0] + cxy, acc[1] + cxz, acc[2] + cyz)

        axy, axz, ayz = lax.fori_loop(bi + 1, num_j, j_body, acc)

        p_xy = p_xy + jnp.sum(axy) * vir_scale
        p_xz = p_xz + jnp.sum(axz) * vir_scale
        p_yz = p_yz + jnp.sum(ayz) * vir_scale

    # Single lane-dense store per grid step: lanes 0..2 carry the result.
    lane = lax.broadcasted_iota(jnp.int32, (1, 128), 1)
    res = jnp.where(lane == 0, p_xy, 0.0)
    res = res + jnp.where(lane == 1, p_xz, 0.0)
    res = res + jnp.where(lane == 2, p_yz, 0.0)
    out_ref[0, 0, :, :] = res


def _pick_tile(n_pad, target):
    t = min(target, n_pad)
    while n_pad % t:
        t -= 128
    return max(t, 128)


def pressure_forward(mass, y, cell, *, sigma, eps, cutoff=CUTOFF,
                     ke_only=False):
    """JAX/Pallas equivalent of pressure_computer.forward.

    mass: (N, 1) f32, y: (T, 2N, 3) f32, cell: (3, 3) f32 (diagonal lattice).
    Returns (T, 3) = [p_xy, p_xz, p_yz] per frame.
    """
    y = y.astype(jnp.float32)
    T = y.shape[0]
    N = y.shape[1] // 2
    n_pad = ((N + 127) // 128) * 128
    pad_n = n_pad - N

    V = y[:, :N, :]                      # velocities
    Q = y[:, N:, :]                      # positions

    v_lane = jnp.pad(jnp.transpose(V, (0, 2, 1)),
                     ((0, 0), (0, 0), (0, pad_n)))           # (T, 3, n_pad)
    q_lane = jnp.pad(jnp.transpose(Q, (0, 2, 1)),
                     ((0, 0), (0, 0), (0, pad_n)))           # (T, 3, n_pad)
    q_sub = jnp.pad(Q, ((0, 0), (0, pad_n), (0, 5)))         # (T, n_pad, 8)
    mass_row = jnp.pad(mass.reshape(1, N).astype(jnp.float32),
                       ((0, 0), (0, pad_n)))                 # (1, n_pad)
    cut_row = jnp.where(jnp.arange(n_pad) < N,
                        jnp.float32(cutoff * cutoff),
                        jnp.float32(-1.0)).reshape(1, n_pad)  # (1, n_pad)

    cell = cell.astype(jnp.float32)
    vol = jnp.linalg.det(cell) * 1e-30
    Ld = jnp.diag(cell)
    params = jnp.concatenate([
        Ld, 0.5 * Ld, 1.0 / Ld,
        jnp.stack([UNIT_CONVERSION / vol,
                   2.0 / vol * VIRIAL_CONST,
                   jnp.float32(sigma * sigma),
                   jnp.float32(24.0 * eps)]),
    ]).astype(jnp.float32)                                   # (13,)

    tile = _pick_tile(n_pad, TILE)
    num_i = 1 if ke_only else (n_pad // tile)

    kernel = functools.partial(_pressure_kernel, n_pad=n_pad, tile=tile,
                               ke_only=ke_only)

    out = pl.pallas_call(
        kernel,
        out_shape=jax.ShapeDtypeStruct((T, num_i, 1, 128), jnp.float32),
        grid=(T, num_i),
        in_specs=[
            pl.BlockSpec(memory_space=pltpu.MemorySpace.SMEM),       # params
            pl.BlockSpec((1, n_pad), lambda t, i: (0, 0)),           # mass
            pl.BlockSpec((1, 3, n_pad), lambda t, i: (t, 0, 0)),     # V frame
            pl.BlockSpec((1, 3, n_pad), lambda t, i: (t, 0, 0)),     # Q (lanes)
            pl.BlockSpec((1, tile, 8), lambda t, i: (t, i, 0)),      # Q (subl.)
            pl.BlockSpec((1, n_pad), lambda t, i: (0, 0)),           # cutoff row
        ],
        out_specs=pl.BlockSpec((1, 1, 1, 128), lambda t, i: (t, i, 0, 0)),
        compiler_params=pltpu.CompilerParams(
            dimension_semantics=("parallel", "parallel")),
    )(params, mass_row, v_lane, q_lane, q_sub, cut_row)

    # Sum the per-i-block partials (KE credited only on i-block 0).
    return jnp.sum(out[:, :, 0, :3], axis=1)


def reference_forward(mass, y, cell, *, sigma, eps, cutoff=CUTOFF,
                      ke_only=False):
    """Pure-JAX reference reproducing the PyTorch semantics (dense mask form)."""
    y = y.astype(jnp.float32)
    N = y.shape[1] // 2
    V, Q = y[:, :N, :], y[:, N:, :]
    m = mass.reshape(1, N).astype(jnp.float32)
    vol = jnp.linalg.det(cell.astype(jnp.float32)) * 1e-30

    p_xy = jnp.sum(V[:, :, 0] * V[:, :, 1] * m, axis=1) / vol * UNIT_CONVERSION
    p_xz = jnp.sum(V[:, :, 0] * V[:, :, 2] * m, axis=1) / vol * UNIT_CONVERSION
    p_yz = jnp.sum(V[:, :, 1] * V[:, :, 2] * m, axis=1) / vol * UNIT_CONVERSION
    ke = jnp.stack([p_xy, p_xz, p_yz], axis=1)
    if ke_only:
        return ke

    Ldiag = jnp.diag(cell.astype(jnp.float32))

    def virial(q):
        d = q[None, :, :] - q[:, None, :]
        off = jnp.floor((d + Ldiag / 2.0) / Ldiag)
        d = d - off * Ldiag
        sq = jnp.sum(d * d, axis=-1)
        i = jnp.arange(N)[:, None]
        j = jnp.arange(N)[None, :]
        mask = (j > i) & (sq < cutoff ** 2) & (sq != 0.0)
        safe = jnp.where(mask, sq, 1.0)
        dist = jnp.sqrt(safe)
        sr2 = sigma * sigma / safe
        sr6 = sr2 ** 3
        fm = 24.0 * eps * (2.0 * sr6 * sr6 - sr6) / dist
        coef = jnp.where(mask, fm / dist, 0.0)
        vxy = jnp.sum(d[..., 0] * d[..., 1] * coef)
        vxz = jnp.sum(d[..., 0] * d[..., 2] * coef)
        vyz = jnp.sum(d[..., 1] * d[..., 2] * coef)
        return jnp.stack([vxy, vxz, vyz]) * 2.0 / vol * VIRIAL_CONST

    return ke + jax.vmap(virial)(Q)


if __name__ == "__main__":
    key = jax.random.PRNGKey(0)
    k1, k2, k3 = jax.random.split(key, 3)

    T, N = 2, 16                         # frames, atoms
    box = 20.0                           # cubic box edge (Angstrom)
    sigma, eps = 3.4, 0.238              # synthetic LJ potential parameters

    # positions: jittered 4x2x2 grid inside the box (keeps pair distances sane)
    gx, gy, gz = jnp.meshgrid(jnp.arange(4) * 5.0 + 2.5,
                              jnp.arange(2) * 10.0 + 5.0,
                              jnp.arange(2) * 10.0 + 5.0, indexing="ij")
    base = jnp.stack([gx.ravel(), gy.ravel(), gz.ravel()], axis=-1)  # (16, 3)
    Q = base[None, :, :] + jax.random.uniform(k1, (T, N, 3),
                                              minval=-0.5, maxval=0.5)
    V = jax.random.normal(k2, (T, N, 3)) * 0.01
    y = jnp.concatenate([V, Q], axis=1).astype(jnp.float32)          # (T, 2N, 3)
    mass = jax.random.uniform(k3, (N, 1), minval=1.0,
                              maxval=40.0).astype(jnp.float32)
    cell = jnp.diag(jnp.array([box, box, box], dtype=jnp.float32))

    out = pressure_forward(mass, y, cell, sigma=sigma, eps=eps)
    out = jax.block_until_ready(out)
    ref = reference_forward(mass, y, cell, sigma=sigma, eps=eps)
    np.testing.assert_allclose(np.asarray(out), np.asarray(ref),
                               rtol=2e-3, atol=1e-1)

    out_ke = pressure_forward(mass, y, cell, sigma=sigma, eps=eps,
                              ke_only=True)
    out_ke = jax.block_until_ready(out_ke)
    ref_ke = reference_forward(mass, y, cell, sigma=sigma, eps=eps,
                               ke_only=True)
    np.testing.assert_allclose(np.asarray(out_ke), np.asarray(ref_ke),
                               rtol=2e-3, atol=1e-1)

    print("KERNEL_OK")
</pallas_src>

<mosaic_0001>
module attributes {stable_mosaic.version = 11 : i64} {
  func.func @_pressure_kernel(%arg0: i32, %arg1: i32, %arg2: memref<13xf32, #tpu.memory_space<smem>>, %arg3: memref<1x128xf32, #tpu.memory_space<vmem>>, %arg4: memref<1x3x128xf32, #tpu.memory_space<vmem>>, %arg5: memref<1x3x128xf32, #tpu.memory_space<vmem>>, %arg6: memref<1x128x8xf32, #tpu.memory_space<vmem>>, %arg7: memref<1x128xf32, #tpu.memory_space<vmem>>, %arg8: memref<1x1x1x128xf32, #tpu.memory_space<vmem>>) attributes {dimension_semantics = [#tpu.dimension_semantics<parallel>, #tpu.dimension_semantics<parallel>], iteration_bounds = array<i64: 2, 1>, scalar_prefetch = 0 : i64, scratch_operands = 0 : i64, tpu.core_type = #tpu.core_type<tc>, window_params = [{transform_indices = @transform_0, window_bounds = array<i64: 13>}, {pipeline_mode = #tpu.pipeline_mode<synchronous>, transform_indices = @transform_1, window_bounds = array<i64: 1, 128>}, {transform_indices = @transform_2, window_bounds = array<i64: 1, 3, 128>}, {transform_indices = @transform_3, window_bounds = array<i64: 1, 3, 128>}, {transform_indices = @transform_4, window_bounds = array<i64: 1, 128, 8>}, {pipeline_mode = #tpu.pipeline_mode<synchronous>, transform_indices = @transform_5, window_bounds = array<i64: 1, 128>}, {transform_indices = @transform_6, window_bounds = array<i64: 1, 1, 1, 128>}]} {
    %c9 = arith.constant 9 : index
    %0 = memref.load %arg2[%c9] : memref<13xf32, #tpu.memory_space<smem>>
    %c0 = arith.constant 0 : index
    %c0_0 = arith.constant 0 : index
    %1 = vector.load %arg3[%c0, %c0_0] : memref<1x128xf32, #tpu.memory_space<vmem>>, vector<1x128xf32>
    %c0_1 = arith.constant 0 : index
    %c0_2 = arith.constant 0 : index
    %c0_3 = arith.constant 0 : index
    %2 = vector.load %arg4[%c0_1, %c0_2, %c0_3] : memref<1x3x128xf32, #tpu.memory_space<vmem>>, vector<1x1x128xf32>
    %3 = vector.shape_cast %2 : vector<1x1x128xf32> to vector<1x128xf32>
    %c0_4 = arith.constant 0 : index
    %c1 = arith.constant 1 : index
    %c0_5 = arith.constant 0 : index
    %4 = vector.load %arg4[%c0_4, %c1, %c0_5] : memref<1x3x128xf32, #tpu.memory_space<vmem>>, vector<1x1x128xf32>
    %5 = vector.shape_cast %4 : vector<1x1x128xf32> to vector<1x128xf32>
    %c0_6 = arith.constant 0 : index
    %c2 = arith.constant 2 : index
    %c0_7 = arith.constant 0 : index
    %6 = vector.load %arg4[%c0_6, %c2, %c0_7] : memref<1x3x128xf32, #tpu.memory_space<vmem>>, vector<1x1x128xf32>
    %7 = vector.shape_cast %6 : vector<1x1x128xf32> to vector<1x128xf32>
    %c0_i32 = arith.constant 0 : i32
    %8 = arith.cmpi eq, %arg1, %c0_i32 : i32
    %cst = arith.constant 1.000000e+00 : f32
    %cst_8 = arith.constant 0.000000e+00 : f32
    %9 = arith.select %8, %cst, %cst_8 : f32
    %10 = arith.mulf %3, %5 : vector<1x128xf32>
    %11 = arith.mulf %10, %1 : vector<1x128xf32>
    %12 = vector.shape_cast %11 : vector<1x128xf32> to vector<1x1x128xf32>
    %cst_9 = arith.constant dense<0.000000e+00> : vector<1xf32>
    %13 = vector.multi_reduction <add>, %12, %cst_9 [1, 2] : vector<1x1x128xf32> to vector<1xf32>
    %14 = vector.shape_cast %13 : vector<1xf32> to vector<1x1x1xf32>
    %15 = vector.extract %14[0, 0, 0] : f32 from vector<1x1x1xf32>
    %16 = arith.mulf %9, %15 : f32
    %17 = arith.mulf %16, %0 : f32
    %18 = arith.mulf %3, %7 : vector<1x128xf32>
    %19 = arith.mulf %18, %1 : vector<1x128xf32>
    %20 = vector.shape_cast %19 : vector<1x128xf32> to vector<1x1x128xf32>
    %cst_10 = arith.constant dense<0.000000e+00> : vector<1xf32>
    %21 = vector.multi_reduction <add>, %20, %cst_10 [1, 2] : vector<1x1x128xf32> to vector<1xf32>
    %22 = vector.shape_cast %21 : vector<1xf32> to vector<1x1x1xf32>
    %23 = vector.extract %22[0, 0, 0] : f32 from vector<1x1x1xf32>
    %24 = arith.mulf %9, %23 : f32
    %25 = arith.mulf %24, %0 : f32
    %26 = arith.mulf %5, %7 : vector<1x128xf32>
    %27 = arith.mulf %26, %1 : vector<1x128xf32>
    %28 = vector.shape_cast %27 : vector<1x128xf32> to vector<1x1x128xf32>
    %cst_11 = arith.constant dense<0.000000e+00> : vector<1xf32>
    %29 = vector.multi_reduction <add>, %28, %cst_11 [1, 2] : vector<1x1x128xf32> to vector<1xf32>
    %30 = vector.shape_cast %29 : vector<1xf32> to vector<1x1x1xf32>
    %31 = vector.extract %30[0, 0, 0] : f32 from vector<1x1x1xf32>
    %32 = arith.mulf %9, %31 : f32
    %33 = arith.mulf %32, %0 : f32
    %c0_12 = arith.constant 0 : index
    %34 = memref.load %arg2[%c0_12] : memref<13xf32, #tpu.memory_space<smem>>
    %c1_13 = arith.constant 1 : index
    %35 = memref.load %arg2[%c1_13] : memref<13xf32, #tpu.memory_space<smem>>
    %c2_14 = arith.constant 2 : index
    %36 = memref.load %arg2[%c2_14] : memref<13xf32, #tpu.memory_space<smem>>
    %c3 = arith.constant 3 : index
    %37 = memref.load %arg2[%c3] : memref<13xf32, #tpu.memory_space<smem>>
    %c4 = arith.constant 4 : index
    %38 = memref.load %arg2[%c4] : memref<13xf32, #tpu.memory_space<smem>>
    %c5 = arith.constant 5 : index
    %39 = memref.load %arg2[%c5] : memref<13xf32, #tpu.memory_space<smem>>
    %c6 = arith.constant 6 : index
    %40 = memref.load %arg2[%c6] : memref<13xf32, #tpu.memory_space<smem>>
    %c7 = arith.constant 7 : index
    %41 = memref.load %arg2[%c7] : memref<13xf32, #tpu.memory_space<smem>>
    %c8 = arith.constant 8 : index
    %42 = memref.load %arg2[%c8] : memref<13xf32, #tpu.memory_space<smem>>
    %c10 = arith.constant 10 : index
    %43 = memref.load %arg2[%c10] : memref<13xf32, #tpu.memory_space<smem>>
    %c11 = arith.constant 11 : index
    %44 = memref.load %arg2[%c11] : memref<13xf32, #tpu.memory_space<smem>>
    %c12 = arith.constant 12 : index
    %45 = memref.load %arg2[%c12] : memref<13xf32, #tpu.memory_space<smem>>
    %c0_15 = arith.constant 0 : index
    %c0_16 = arith.constant 0 : index
    %c0_17 = arith.constant 0 : index
    %46 = vector.load %arg6[%c0_15, %c0_16, %c0_17] : memref<1x128x8xf32, #tpu.memory_space<vmem>>, vector<1x128x1xf32>
    %47 = vector.shape_cast %46 : vector<1x128x1xf32> to vector<128x1xf32>
    %c0_18 = arith.constant 0 : index
    %c0_19 = arith.constant 0 : index
    %c1_20 = arith.constant 1 : index
    %48 = vector.load %arg6[%c0_18, %c0_19, %c1_20] : memref<1x128x8xf32, #tpu.memory_space<vmem>>, vector<1x128x1xf32>
    %49 = vector.shape_cast %48 : vector<1x128x1xf32> to vector<128x1xf32>
    %c0_21 = arith.constant 0 : index
    %c0_22 = arith.constant 0 : index
    %c2_23 = arith.constant 2 : index
    %50 = vector.load %arg6[%c0_21, %c0_22, %c2_23] : memref<1x128x8xf32, #tpu.memory_space<vmem>>, vector<1x128x1xf32>
    %51 = vector.shape_cast %50 : vector<1x128x1xf32> to vector<128x1xf32>
    %c128_i32 = arith.constant 128 : i32
    %52 = arith.muli %arg1, %c128_i32 : i32
    %53 = tpu.assume_multiple %52, 128 : i32
    %c0_24 = arith.constant 0 : index
    %c0_25 = arith.constant 0 : index
    %54 = arith.index_cast %53 : i32 to index
    %55 = vector.load %arg5[%c0_24, %c0_25, %54] : memref<1x3x128xf32, #tpu.memory_space<vmem>>, vector<1x3x128xf32>
    %56 = vector.shape_cast %55 : vector<1x3x128xf32> to vector<3x128xf32>
    %c0_26 = arith.constant 0 : index
    %57 = arith.index_cast %53 : i32 to index
    %58 = vector.load %arg7[%c0_26, %57] : memref<1x128xf32, #tpu.memory_space<vmem>>, vector<1x128xf32>
    %59 = vector.extract_strided_slice %56 {offsets = [0, 0], sizes = [1, 128], strides = [1, 1]} : vector<3x128xf32> to vector<1x128xf32>
    %60 = vector.broadcast %59 : vector<1x128xf32> to vector<128x128xf32>
    %61 = vector.broadcast %47 : vector<128x1xf32> to vector<128x128xf32>
    %62 = arith.subf %60, %61 : vector<128x128xf32>
    %63 = vector.broadcast %37 : f32 to vector<128x128xf32>
    %64 = arith.addf %62, %63 : vector<128x128xf32>
    %65 = vector.broadcast %40 : f32 to vector<128x128xf32>
    %66 = arith.mulf %64, %65 : vector<128x128xf32>
    %67 = math.floor %66 : vector<128x128xf32>
    %68 = vector.broadcast %34 : f32 to vector<128x128xf32>
    %69 = arith.mulf %67, %68 : vector<128x128xf32>
    %70 = arith.subf %62, %69 : vector<128x128xf32>
    %71 = vector.extract_strided_slice %56 {offsets = [1, 0], sizes = [1, 128], strides = [1, 1]} : vector<3x128xf32> to vector<1x128xf32>
    %72 = vector.broadcast %71 : vector<1x128xf32> to vector<128x128xf32>
    %73 = vector.broadcast %49 : vector<128x1xf32> to vector<128x128xf32>
    %74 = arith.subf %72, %73 : vector<128x128xf32>
    %75 = vector.broadcast %38 : f32 to vector<128x128xf32>
    %76 = arith.addf %74, %75 : vector<128x128xf32>
    %77 = vector.broadcast %41 : f32 to vector<128x128xf32>
    %78 = arith.mulf %76, %77 : vector<128x128xf32>
    %79 = math.floor %78 : vector<128x128xf32>
    %80 = vector.broadcast %35 : f32 to vector<128x128xf32>
    %81 = arith.mulf %79, %80 : vector<128x128xf32>
    %82 = arith.subf %74, %81 : vector<128x128xf32>
    %83 = vector.extract_strided_slice %56 {offsets = [2, 0], sizes = [1, 128], strides = [1, 1]} : vector<3x128xf32> to vector<1x128xf32>
    %84 = vector.broadcast %83 : vector<1x128xf32> to vector<128x128xf32>
    %85 = vector.broadcast %51 : vector<128x1xf32> to vector<128x128xf32>
    %86 = arith.subf %84, %85 : vector<128x128xf32>
    %87 = vector.broadcast %39 : f32 to vector<128x128xf32>
    %88 = arith.addf %86, %87 : vector<128x128xf32>
    %89 = vector.broadcast %42 : f32 to vector<128x128xf32>
    %90 = arith.mulf %88, %89 : vector<128x128xf32>
    %91 = math.floor %90 : vector<128x128xf32>
    %92 = vector.broadcast %36 : f32 to vector<128x128xf32>
    %93 = arith.mulf %91, %92 : vector<128x128xf32>
    %94 = arith.subf %86, %93 : vector<128x128xf32>
    %95 = arith.mulf %70, %70 : vector<128x128xf32>
    %96 = arith.mulf %82, %82 : vector<128x128xf32>
    %97 = arith.addf %95, %96 : vector<128x128xf32>
    %98 = arith.mulf %94, %94 : vector<128x128xf32>
    %99 = arith.addf %97, %98 : vector<128x128xf32>
    %100 = vector.broadcast %58 : vector<1x128xf32> to vector<128x128xf32>
    %101 = arith.cmpf olt, %99, %100 : vector<128x128xf32>
    %cst_27 = arith.constant 0.000000e+00 : f32
    %102 = vector.broadcast %cst_27 : f32 to vector<128x128xf32>
    %103 = arith.cmpf one, %99, %102 : vector<128x128xf32>
    %104 = arith.andi %101, %103 : vector<128x128xi1>
    %105 = tpu.iota {dimensions = array<i32: 0>} : vector<128x128xi32>
    %106 = tpu.iota {dimensions = array<i32: 1>} : vector<128x128xi32>
    %107 = arith.cmpi sgt, %106, %105 : vector<128x128xi32>
    %108 = arith.andi %104, %107 : vector<128x128xi1>
    %109 = tpu.reciprocal %99 {approx = true} : vector<128x128xf32> -> vector<128x128xf32>
    %110 = arith.mulf %99, %109 : vector<128x128xf32>
    %cst_28 = arith.constant 2.000000e+00 : f32
    %111 = vector.broadcast %cst_28 : f32 to vector<128x128xf32>
    %112 = arith.subf %111, %110 : vector<128x128xf32>
    %113 = arith.mulf %109, %112 : vector<128x128xf32>
    %114 = vector.broadcast %44 : f32 to vector<128x128xf32>
    %115 = arith.mulf %114, %113 : vector<128x128xf32>
    %116 = arith.mulf %115, %115 : vector<128x128xf32>
    %117 = arith.mulf %116, %115 : vector<128x128xf32>
    %cst_29 = arith.constant 2.000000e+00 : f32
    %118 = vector.broadcast %cst_29 : f32 to vector<128x128xf32>
    %119 = arith.mulf %118, %117 : vector<128x128xf32>
    %120 = arith.mulf %119, %117 : vector<128x128xf32>
    %121 = arith.subf %120, %117 : vector<128x128xf32>
    %122 = vector.broadcast %45 : f32 to vector<128x128xf32>
    %123 = arith.mulf %122, %121 : vector<128x128xf32>
    %124 = arith.mulf %123, %113 : vector<128x128xf32>
    %cst_30 = arith.constant 0.000000e+00 : f32
    %125 = vector.broadcast %cst_30 : f32 to vector<128x128xf32>
    %126 = arith.select %108, %124, %125 : vector<128x128xi1>, vector<128x128xf32>
    %127 = arith.mulf %70, %126 : vector<128x128xf32>
    %128 = arith.mulf %82, %126 : vector<128x128xf32>
    %129 = arith.mulf %127, %82 : vector<128x128xf32>
    %cst_31 = arith.constant dense<0.000000e+00> : vector<128xf32>
    %130 = vector.multi_reduction <add>, %129, %cst_31 [0] : vector<128x128xf32> to vector<128xf32>
    %131 = vector.shape_cast %130 : vector<128xf32> to vector<1x128xf32>
    %132 = arith.mulf %127, %94 : vector<128x128xf32>
    %cst_32 = arith.constant dense<0.000000e+00> : vector<128xf32>
    %133 = vector.multi_reduction <add>, %132, %cst_32 [0] : vector<128x128xf32> to vector<128xf32>
    %134 = vector.shape_cast %133 : vector<128xf32> to vector<1x128xf32>
    %135 = arith.mulf %128, %94 : vector<128x128xf32>
    %cst_33 = arith.constant dense<0.000000e+00> : vector<128xf32>
    %136 = vector.multi_reduction <add>, %135, %cst_33 [0] : vector<128x128xf32> to vector<128xf32>
    %137 = vector.shape_cast %136 : vector<128xf32> to vector<1x128xf32>
    %c1_i32 = arith.constant 1 : i32
    %138 = arith.addi %arg1, %c1_i32 : i32
    %c1_i32_34 = arith.constant 1 : i32
    %139 = arith.subi %c1_i32_34, %138 : i32
    %140 = arith.addi %138, %139 : i32
    %c1_i32_35 = arith.constant 1 : i32
    %141:3 = scf.for %arg9 = %138 to %140 step %c1_i32_35 iter_args(%arg10 = %131, %arg11 = %134, %arg12 = %137) -> (vector<1x128xf32>, vector<1x128xf32>, vector<1x128xf32>)  : i32 {
      %c128_i32_48 = arith.constant 128 : i32
      %181 = arith.muli %arg9, %c128_i32_48 : i32
      %182 = tpu.assume_multiple %181, 128 : i32
      %c0_49 = arith.constant 0 : index
      %c0_50 = arith.constant 0 : index
      %183 = arith.index_cast %182 : i32 to index
      %184 = vector.load %arg5[%c0_49, %c0_50, %183] : memref<1x3x128xf32, #tpu.memory_space<vmem>>, vector<1x3x128xf32>
      %185 = vector.shape_cast %184 : vector<1x3x128xf32> to vector<3x128xf32>
      %c0_51 = arith.constant 0 : index
      %186 = arith.index_cast %182 : i32 to index
      %187 = vector.load %arg7[%c0_51, %186] : memref<1x128xf32, #tpu.memory_space<vmem>>, vector<1x128xf32>
      %188 = vector.extract_strided_slice %185 {offsets = [0, 0], sizes = [1, 128], strides = [1, 1]} : vector<3x128xf32> to vector<1x128xf32>
      %189 = vector.broadcast %188 : vector<1x128xf32> to vector<128x128xf32>
      %190 = vector.broadcast %47 : vector<128x1xf32> to vector<128x128xf32>
      %191 = arith.subf %189, %190 : vector<128x128xf32>
      %192 = vector.broadcast %37 : f32 to vector<128x128xf32>
      %193 = arith.addf %191, %192 : vector<128x128xf32>
      %194 = vector.broadcast %40 : f32 to vector<128x128xf32>
      %195 = arith.mulf %193, %194 : vector<128x128xf32>
      %196 = math.floor %195 : vector<128x128xf32>
      %197 = vector.broadcast %34 : f32 to vector<128x128xf32>
      %198 = arith.mulf %196, %197 : vector<128x128xf32>
      %199 = arith.subf %191, %198 : vector<128x128xf32>
      %200 = vector.extract_strided_slice %185 {offsets = [1, 0], sizes = [1, 128], strides = [1, 1]} : vector<3x128xf32> to vector<1x128xf32>
      %201 = vector.broadcast %200 : vector<1x128xf32> to vector<128x128xf32>
      %202 = vector.broadcast %49 : vector<128x1xf32> to vector<128x128xf32>
      %203 = arith.subf %201, %202 : vector<128x128xf32>
      %204 = vector.broadcast %38 : f32 to vector<128x128xf32>
      %205 = arith.addf %203, %204 : vector<128x128xf32>
      %206 = vector.broadcast %41 : f32 to vector<128x128xf32>
      %207 = arith.mulf %205, %206 : vector<128x128xf32>
      %208 = math.floor %207 : vector<128x128xf32>
      %209 = vector.broadcast %35 : f32 to vector<128x128xf32>
      %210 = arith.mulf %208, %209 : vector<128x128xf32>
      %211 = arith.subf %203, %210 : vector<128x128xf32>
      %212 = vector.extract_strided_slice %185 {offsets = [2, 0], sizes = [1, 128], strides = [1, 1]} : vector<3x128xf32> to vector<1x128xf32>
      %213 = vector.broadcast %212 : vector<1x128xf32> to vector<128x128xf32>
      %214 = vector.broadcast %51 : vector<128x1xf32> to vector<128x128xf32>
      %215 = arith.subf %213, %214 : vector<128x128xf32>
      %216 = vector.broadcast %39 : f32 to vector<128x128xf32>
      %217 = arith.addf %215, %216 : vector<128x128xf32>
      %218 = vector.broadcast %42 : f32 to vector<128x128xf32>
      %219 = arith.mulf %217, %218 : vector<128x128xf32>
      %220 = math.floor %219 : vector<128x128xf32>
      %221 = vector.broadcast %36 : f32 to vector<128x128xf32>
      %222 = arith.mulf %220, %221 : vector<128x128xf32>
      %223 = arith.subf %215, %222 : vector<128x128xf32>
      %224 = arith.mulf %199, %199 : vector<128x128xf32>
      %225 = arith.mulf %211, %211 : vector<128x128xf32>
      %226 = arith.addf %224, %225 : vector<128x128xf32>
      %227 = arith.mulf %223, %223 : vector<128x128xf32>
      %228 = arith.addf %226, %227 : vector<128x128xf32>
      %229 = vector.broadcast %187 : vector<1x128xf32> to vector<128x128xf32>
      %230 = arith.cmpf olt, %228, %229 : vector<128x128xf32>
      %cst_52 = arith.constant 0.000000e+00 : f32
      %231 = vector.broadcast %cst_52 : f32 to vector<128x128xf32>
      %232 = arith.cmpf one, %228, %231 : vector<128x128xf32>
      %233 = arith.andi %230, %232 : vector<128x128xi1>
      %234 = tpu.reciprocal %228 {approx = true} : vector<128x128xf32> -> vector<128x128xf32>
      %235 = arith.mulf %228, %234 : vector<128x128xf32>
      %cst_53 = arith.constant 2.000000e+00 : f32
      %236 = vector.broadcast %cst_53 : f32 to vector<128x128xf32>
      %237 = arith.subf %236, %235 : vector<128x128xf32>
      %238 = arith.mulf %234, %237 : vector<128x128xf32>
      %239 = vector.broadcast %44 : f32 to vector<128x128xf32>
      %240 = arith.mulf %239, %238 : vector<128x128xf32>
      %241 = arith.mulf %240, %240 : vector<128x128xf32>
      %242 = arith.mulf %241, %240 : vector<128x128xf32>
      %cst_54 = arith.constant 2.000000e+00 : f32
      %243 = vector.broadcast %cst_54 : f32 to vector<128x128xf32>
      %244 = arith.mulf %243, %242 : vector<128x128xf32>
      %245 = arith.mulf %244, %242 : vector<128x128xf32>
      %246 = arith.subf %245, %242 : vector<128x128xf32>
      %247 = vector.broadcast %45 : f32 to vector<128x128xf32>
      %248 = arith.mulf %247, %246 : vector<128x128xf32>
      %249 = arith.mulf %248, %238 : vector<128x128xf32>
      %cst_55 = arith.constant 0.000000e+00 : f32
      %250 = vector.broadcast %cst_55 : f32 to vector<128x128xf32>
      %251 = arith.select %233, %249, %250 : vector<128x128xi1>, vector<128x128xf32>
      %252 = arith.mulf %199, %251 : vector<128x128xf32>
      %253 = arith.mulf %211, %251 : vector<128x128xf32>
      %254 = arith.mulf %252, %211 : vector<128x128xf32>
      %cst_56 = arith.constant dense<0.000000e+00> : vector<128xf32>
      %255 = vector.multi_reduction <add>, %254, %cst_56 [0] : vector<128x128xf32> to vector<128xf32>
      %256 = vector.shape_cast %255 : vector<128xf32> to vector<1x128xf32>
      %257 = arith.mulf %252, %223 : vector<128x128xf32>
      %cst_57 = arith.constant dense<0.000000e+00> : vector<128xf32>
      %258 = vector.multi_reduction <add>, %257, %cst_57 [0] : vector<128x128xf32> to vector<128xf32>
      %259 = vector.shape_cast %258 : vector<128xf32> to vector<1x128xf32>
      %260 = arith.mulf %253, %223 : vector<128x128xf32>
      %cst_58 = arith.constant dense<0.000000e+00> : vector<128xf32>
      %261 = vector.multi_reduction <add>, %260, %cst_58 [0] : vector<128x128xf32> to vector<128xf32>
      %262 = vector.shape_cast %261 : vector<128xf32> to vector<1x128xf32>
      %263 = arith.addf %arg10, %256 : vector<1x128xf32>
      %264 = arith.addf %arg11, %259 : vector<1x128xf32>
      %265 = arith.addf %arg12, %262 : vector<1x128xf32>
      scf.yield %263, %264, %265 : vector<1x128xf32>, vector<1x128xf32>, vector<1x128xf32>
    }
    %142 = vector.shape_cast %141#0 : vector<1x128xf32> to vector<1x1x128xf32>
    %cst_36 = arith.constant dense<0.000000e+00> : vector<1xf32>
    %143 = vector.multi_reduction <add>, %142, %cst_36 [1, 2] : vector<1x1x128xf32> to vector<1xf32>
    %144 = vector.shape_cast %143 : vector<1xf32> to vector<1x1x1xf32>
    %145 = vector.extract %144[0, 0, 0] : f32 from vector<1x1x1xf32>
    %146 = arith.mulf %145, %43 : f32
    %147 = arith.addf %17, %146 : f32
    %148 = vector.shape_cast %141#1 : vector<1x128xf32> to vector<1x1x128xf32>
    %cst_37 = arith.constant dense<0.000000e+00> : vector<1xf32>
    %149 = vector.multi_reduction <add>, %148, %cst_37 [1, 2] : vector<1x1x128xf32> to vector<1xf32>
    %150 = vector.shape_cast %149 : vector<1xf32> to vector<1x1x1xf32>
    %151 = vector.extract %150[0, 0, 0] : f32 from vector<1x1x1xf32>
    %152 = arith.mulf %151, %43 : f32
    %153 = arith.addf %25, %152 : f32
    %154 = vector.shape_cast %141#2 : vector<1x128xf32> to vector<1x1x128xf32>
    %cst_38 = arith.constant dense<0.000000e+00> : vector<1xf32>
    %155 = vector.multi_reduction <add>, %154, %cst_38 [1, 2] : vector<1x1x128xf32> to vector<1xf32>
    %156 = vector.shape_cast %155 : vector<1xf32> to vector<1x1x1xf32>
    %157 = vector.extract %156[0, 0, 0] : f32 from vector<1x1x1xf32>
    %158 = arith.mulf %157, %43 : f32
    %159 = arith.addf %33, %158 : f32
    %160 = tpu.iota {dimensions = array<i32: 1>} : vector<1x128xi32>
    %c0_i32_39 = arith.constant 0 : i32
    %161 = vector.broadcast %c0_i32_39 : i32 to vector<1x128xi32>
    %162 = arith.cmpi eq, %160, %161 : vector<1x128xi32>
    %cst_40 = arith.constant 0.000000e+00 : f32
    %163 = vector.broadcast %147 : f32 to vector<1x128xf32>
    %164 = vector.broadcast %cst_40 : f32 to vector<1x128xf32>
    %165 = arith.select %162, %163, %164 : vector<1x128xi1>, vector<1x128xf32>
    %c1_i32_41 = arith.constant 1 : i32
    %166 = vector.broadcast %c1_i32_41 : i32 to vector<1x128xi32>
    %167 = arith.cmpi eq, %160, %166 : vector<1x128xi32>
    %cst_42 = arith.constant 0.000000e+00 : f32
    %168 = vector.broadcast %153 : f32 to vector<1x128xf32>
    %169 = vector.broadcast %cst_42 : f32 to vector<1x128xf32>
    %170 = arith.select %167, %168, %169 : vector<1x128xi1>, vector<1x128xf32>
    %171 = arith.addf %165, %170 : vector<1x128xf32>
    %c2_i32 = arith.constant 2 : i32
    %172 = vector.broadcast %c2_i32 : i32 to vector<1x128xi32>
    %173 = arith.cmpi eq, %160, %172 : vector<1x128xi32>
    %cst_43 = arith.constant 0.000000e+00 : f32
    %174 = vector.broadcast %159 : f32 to vector<1x128xf32>
    %175 = vector.broadcast %cst_43 : f32 to vector<1x128xf32>
    %176 = arith.select %173, %174, %175 : vector<1x128xi1>, vector<1x128xf32>
    %177 = arith.addf %171, %176 : vector<1x128xf32>
    %c0_44 = arith.constant 0 : index
    %c0_45 = arith.constant 0 : index
    %c0_46 = arith.constant 0 : index
    %c0_47 = arith.constant 0 : index
    %178 = vector.load %arg8[%c0_44, %c0_45, %c0_46, %c0_47] : memref<1x1x1x128xf32, #tpu.memory_space<vmem>>, vector<1x1x1x128xf32>
    %179 = vector.shape_cast %178 : vector<1x1x1x128xf32> to vector<1x128xf32>
    %180 = vector.shape_cast %177 : vector<1x128xf32> to vector<1x1x1x128xf32>
    tpu.vector_store %arg8[%c0_44, %c0_45, %c0_46, %c0_47], %180 {strides = array<i32>} : memref<1x1x1x128xf32, #tpu.memory_space<vmem>>, vector<1x1x1x128xf32>,
    return
  }
  func.func @transform_0(%arg0: i32, %arg1: i32) -> i32 {
    %c0_i32 = arith.constant 0 : i32
    %c0_i32_0 = arith.constant 0 : i32
    return %c0_i32 : i32
  }
  func.func @transform_1(%arg0: i32, %arg1: i32) -> (i32, i32) {
    %c0_i32 = arith.constant 0 : i32
    %c0_i32_0 = arith.constant 0 : i32
    %c0_i32_1 = arith.constant 0 : i32
    return %c0_i32, %c0_i32_0 : i32, i32
  }
  func.func @transform_2(%arg0: i32, %arg1: i32) -> (i32, i32, i32) {
    %c0_i32 = arith.constant 0 : i32
    %c0_i32_0 = arith.constant 0 : i32
    %c0_i32_1 = arith.constant 0 : i32
    return %arg0, %c0_i32, %c0_i32_0 : i32, i32, i32
  }
  func.func @transform_3(%arg0: i32, %arg1: i32) -> (i32, i32, i32) {
    %c0_i32 = arith.constant 0 : i32
    %c0_i32_0 = arith.constant 0 : i32
    %c0_i32_1 = arith.constant 0 : i32
    return %arg0, %c0_i32, %c0_i32_0 : i32, i32, i32
  }
  func.func @transform_4(%arg0: i32, %arg1: i32) -> (i32, i32, i32) {
    %c0_i32 = arith.constant 0 : i32
    %c0_i32_0 = arith.constant 0 : i32
    return %arg0, %arg1, %c0_i32 : i32, i32, i32
  }
  func.func @transform_5(%arg0: i32, %arg1: i32) -> (i32, i32) {
    %c0_i32 = arith.constant 0 : i32
    %c0_i32_0 = arith.constant 0 : i32
    %c0_i32_1 = arith.constant 0 : i32
    return %c0_i32, %c0_i32_0 : i32, i32
  }
  func.func @transform_6(%arg0: i32, %arg1: i32) -> (i32, i32, i32, i32) {
    %c0_i32 = arith.constant 0 : i32
    %c0_i32_0 = arith.constant 0 : i32
    %c0_i32_1 = arith.constant 0 : i32
    return %arg0, %arg1, %c0_i32, %c0_i32_0 : i32, i32, i32, i32
  }
}

</mosaic_0001>

<llo_original>
// kernel: tpu_custom_call.1
$region0: #{tpu_custom_call.1}
  #allocation0 [shape = 'u32[]', space=smem, size = 0x4, offset = 0x4, fixed_abs, tag = 'smem constant byte address 0x4 - core index']
  #allocation1 [shape = 'u32[144,128]{1,0:T(1,128)}', space=vmem, size = 0x12000, scoped, tag = 'internal scratch']
  %s0 = inlined_call_operand.vmem [shape: f32[13], index: 0, kind: input, shape index: {}]
  %s1 = inlined_call_operand.vmem [shape: f32[1,128], index: 1, kind: input, shape index: {}]
  %s2 = inlined_call_operand.vmem [shape: f32[2,3,128], index: 2, kind: input, shape index: {}]
  %s3 = inlined_call_operand.vmem [shape: f32[2,3,128], index: 3, kind: input, shape index: {}]
  %s4 = inlined_call_operand.vmem [shape: f32[2,128,8], index: 4, kind: input, shape index: {}]
  %s5 = inlined_call_operand.vmem [shape: f32[1,128], index: 5, kind: input, shape index: {}]
  %s6 = inlined_call_operand.hbm [shape: f32[2,1,1,128], index: 6, kind: output, shape index: {}]
  %s7 = sld [smem:[#allocation0]]
  $region68: #{tpu_custom_call.1} parent=0
    _
  %s9 = ssub.s32 1, %s7
  %s10 = scalar_select 0, %s9, %s7
  $region1: #{tpu_custom_call.1} parent=0
    #allocation2 [shape = 'u8[512]{0}', space=smem, size = 0x200, scoped, tag = 'input window, operand 0, single buffered']
    #allocation3 [shape = 's32[2]{0}', space=sflag, size = 0x8, scoped, tag = 'scoped memory for tpu_custom_call.1']
    #allocation4 [shape = 's32[2]{0}', space=sflag, size = 0x8, scoped, tag = 'scoped memory for tpu_custom_call.1']
    #allocation5 [shape = 'u8[1024]{0}', space=vmem, size = 0x400, scoped, tag = 'output window, operand 0']
    %11 = vsyncpa [#allocation4], 0
    %12 = vsyncpa [#allocation3], 0
    %s13 = scalar_lea.sflag [#allocation3], 1
    %14 = vsyncpa %s13, 0
    loop: start=0, step=1, limit=4
    $region2: #{tpu_custom_call.1} parent=1 // loop_pre_header
      _
    $region3: #{tpu_custom_call.1} parent=1 // loop_header
      %s16 = sphi 0, %s20
      %p17 = scmp.ge.s32.totalorder %s16, 4
      %s23 = sphi 0, %s35
      %s24 = sphi 0, %s31
      %s25 = sphi 0, %s23
      %s26 = sphi 0, %s24
      %s27 = sphi 0, %s25
      %s28 = sphi 0, %s26
      %s36 = sphi 0, %s36
      %s38 = sphi 0, %s36
      %s39 = sphi 0, %s38
      %s53 = sphi 0, %s39
      %s57 = sphi 0, %s57
      %s59 = sphi 0, %s57
      %s60 = sphi 0, %s59
      %s74 = sphi 0, %s60
      %s80 = sphi 0, %s82
      %s83 = sphi 0, %s80
      %s84 = sphi 0, %s83
      %s100 = sphi 0, %s84
      %s106 = sphi 0, %s108
      %s109 = sphi 0, %s106
      %s110 = sphi 0, %s109
      %s126 = sphi 0, %s110
      %s134 = sphi 0, %s136
      %s137 = sphi 0, %s134
      %s138 = sphi 0, %s137
      %s154 = sphi 0, %s138
      %s158 = sphi 0, %s158
      %s160 = sphi 0, %s158
      %s161 = sphi 0, %s160
      %s175 = sphi 0, %s161
      %s183 = sphi 0, %s185
      %s186 = sphi 0, %s183
      %s187 = sphi 0, %s186
      %s203 = sphi 0, %s187
    $region4: #{tpu_custom_call.1} parent=1 // loop_header_branch
      %19 = sbr.rel (%p17) target = $region8
    $region5: #{tpu_custom_call.1} parent=1 // loop_body
      %s21 = ssub.s32 %s16, 1
      %s22 = ssub.s32 %s16, 2
      %s29 = sadd.s32 1, %s24
      %p30 = scmp.ge.s32.totalorder %s29, 1
      %s31 = scalar_select %p30, 0, %s29
      %s32 = sadd.s32 1, %s23
      %s33 = scalar_select %p30, %s32, %s23
      %p34 = scmp.ge.s32.totalorder %s33, 2
      %s35 = scalar_select %p34, 0, %s33
      %s37 = sadd.s32 %s36, 1
      %p40 = scmp.eq.s32.totalorder %s16, 1
      %p41 = scmp.ne.s32.totalorder %s36, %s38
      %p42 = scmp.eq.s32.totalorder %s16, 0
      %p43 = por %p41, %p42
      %p44 = scmp.ne.s32.totalorder %s36, %s38
      %p45 = scmp.eq.s32.totalorder %s21, 1
      %p46 = por %p44, %p45
      %p47 = scmp.ne.s32.totalorder %s38, %s39
      %p48 = scmp.eq.s32.totalorder %s21, 0
      %p49 = por %p47, %p48
      %p50 = scmp.ne.s32.totalorder %s38, %s39
      %p51 = scmp.eq.s32.totalorder %s22, 1
      %p52 = por %p50, %p51
      %p54 = scmp.ne.s32.totalorder %s39, %s53
      %p55 = scmp.eq.s32.totalorder %s22, 0
      %p56 = por %p54, %p55
      %s58 = sadd.s32 %s57, 1
      %p61 = scmp.eq.s32.totalorder %s16, 1
      %p62 = scmp.ne.s32.totalorder %s57, %s59
      %p63 = scmp.eq.s32.totalorder %s16, 0
      %p64 = por %p62, %p63
      %p65 = scmp.ne.s32.totalorder %s57, %s59
      %p66 = scmp.eq.s32.totalorder %s21, 1
      %p67 = por %p65, %p66
      %p68 = scmp.ne.s32.totalorder %s59, %s60
      %p69 = scmp.eq.s32.totalorder %s21, 0
      %p70 = por %p68, %p69
      %p71 = scmp.ne.s32.totalorder %s59, %s60
      %p72 = scmp.eq.s32.totalorder %s22, 1
      %p73 = por %p71, %p72
      %p75 = scmp.ne.s32.totalorder %s60, %s74
      %p76 = scmp.eq.s32.totalorder %s22, 0
      %p77 = por %p75, %p76
      %s78 = ssub.s32 %s23, %s35
      %p79 = scmp.eq.s32.totalorder %s78, 0
      %s81 = sadd.s32 %s80, 1
      %s82 = scalar_select %p79, %s80, %s81
      %p85 = pneg %p79
      %p86 = scmp.eq.s32.totalorder %s16, 1
      %p87 = por %p85, %p86
      %p88 = scmp.ne.s32.totalorder %s80, %s83
      %p89 = scmp.eq.s32.totalorder %s16, 0
      %p90 = por %p88, %p89
      %p91 = scmp.ne.s32.totalorder %s80, %s83
      %p92 = scmp.eq.s32.totalorder %s21, 1
      %p93 = por %p91, %p92
      %p94 = scmp.ne.s32.totalorder %s83, %s84
      %p95 = scmp.eq.s32.totalorder %s21, 0
      %p96 = por %p94, %p95
      %p97 = scmp.ne.s32.totalorder %s83, %s84
      %p98 = scmp.eq.s32.totalorder %s22, 1
      %p99 = por %p97, %p98
      %p101 = scmp.ne.s32.totalorder %s84, %s100
      %p102 = scmp.eq.s32.totalorder %s22, 0
      %p103 = por %p101, %p102
      %s104 = ssub.s32 %s23, %s35
      %p105 = scmp.eq.s32.totalorder %s104, 0
      %s107 = sadd.s32 %s106, 1
      %s108 = scalar_select %p105, %s106, %s107
      %p111 = pneg %p105
      %p112 = scmp.eq.s32.totalorder %s16, 1
      %p113 = por %p111, %p112
      %p114 = scmp.ne.s32.totalorder %s106, %s109
      %p115 = scmp.eq.s32.totalorder %s16, 0
      %p116 = por %p114, %p115
      %p117 = scmp.ne.s32.totalorder %s106, %s109
      %p118 = scmp.eq.s32.totalorder %s21, 1
      %p119 = por %p117, %p118
      %p120 = scmp.ne.s32.totalorder %s109, %s110
      %p121 = scmp.eq.s32.totalorder %s21, 0
      %p122 = por %p120, %p121
      %p123 = scmp.ne.s32.totalorder %s109, %s110
      %p124 = scmp.eq.s32.totalorder %s22, 1
      %p125 = por %p123, %p124
      %p127 = scmp.ne.s32.totalorder %s110, %s126
      %p128 = scmp.eq.s32.totalorder %s22, 0
      %p129 = por %p127, %p128
      %s130 = ssub.s32 %s23, %s35
      %s131 = ssub.s32 %s24, %s31
      %s132 = sor.u32 %s130, %s131
      %p133 = scmp.eq.s32.totalorder %s132, 0
      %s135 = sadd.s32 %s134, 1
      %s136 = scalar_select %p133, %s134, %s135
      %p139 = pneg %p133
      %p140 = scmp.eq.s32.totalorder %s16, 1
      %p141 = por %p139, %p140
      %p142 = scmp.ne.s32.totalorder %s134, %s137
      %p143 = scmp.eq.s32.totalorder %s16, 0
      %p144 = por %p142, %p143
      %p145 = scmp.ne.s32.totalorder %s134, %s137
      %p146 = scmp.eq.s32.totalorder %s21, 1
      %p147 = por %p145, %p146
      %p148 = scmp.ne.s32.totalorder %s137, %s138
      %p149 = scmp.eq.s32.totalorder %s21, 0
      %p150 = por %p148, %p149
      %p151 = scmp.ne.s32.totalorder %s137, %s138
      %p152 = scmp.eq.s32.totalorder %s22, 1
      %p153 = por %p151, %p152
      %p155 = scmp.ne.s32.totalorder %s138, %s154
      %p156 = scmp.eq.s32.totalorder %s22, 0
      %p157 = por %p155, %p156
      %s159 = sadd.s32 %s158, 1
      %p162 = scmp.eq.s32.totalorder %s16, 1
      %p163 = scmp.ne.s32.totalorder %s158, %s160
      %p164 = scmp.eq.s32.totalorder %s16, 0
      %p165 = por %p163, %p164
      %p166 = scmp.ne.s32.totalorder %s158, %s160
      %p167 = scmp.eq.s32.totalorder %s21, 1
      %p168 = por %p166, %p167
      %p169 = scmp.ne.s32.totalorder %s160, %s161
      %p170 = scmp.eq.s32.totalorder %s21, 0
      %p171 = por %p169, %p170
      %p172 = scmp.ne.s32.totalorder %s160, %s161
      %p173 = scmp.eq.s32.totalorder %s22, 1
      %p174 = por %p172, %p173
      %p176 = scmp.ne.s32.totalorder %s161, %s175
      %p177 = scmp.eq.s32.totalorder %s22, 0
      %p178 = por %p176, %p177
      %s179 = ssub.s32 %s23, %s35
      %s180 = ssub.s32 %s24, %s31
      %s181 = sor.u32 %s179, %s180
      %p182 = scmp.eq.s32.totalorder %s181, 0
      %s184 = sadd.s32 %s183, 1
      %s185 = scalar_select %p182, %s183, %s184
      %p188 = pneg %p182
      %p189 = scmp.eq.s32.totalorder %s16, 1
      %p190 = por %p188, %p189
      %p191 = scmp.ne.s32.totalorder %s183, %s186
      %p192 = scmp.eq.s32.totalorder %s16, 0
      %p193 = por %p191, %p192
      %p194 = scmp.ne.s32.totalorder %s183, %s186
      %p195 = scmp.eq.s32.totalorder %s21, 1
      %p196 = por %p194, %p195
      %p197 = scmp.ne.s32.totalorder %s186, %s187
      %p198 = scmp.eq.s32.totalorder %s21, 0
      %p199 = por %p197, %p198
      %p200 = scmp.ne.s32.totalorder %s186, %s187
      %p201 = scmp.eq.s32.totalorder %s22, 1
      %p202 = por %p200, %p201
      %p204 = scmp.ne.s32.totalorder %s187, %s203
      %p205 = scmp.eq.s32.totalorder %s22, 0
      %p206 = por %p204, %p205
      %p207 = scmp.le.s32.totalorder 1, %s16
      %p208 = scmp.lt.s32.totalorder %s16, 3
      %p209 = pnand %p207, %p208
      %p210 = pneg %p209
      // Predicated region
      $region9: #{tpu_custom_call.1} parent=5 // pred_check
        _
      $region10: #{tpu_custom_call.1} parent=5 // pred_check_branch
        %212 = sbr.rel (%p209) target = $region12
      $region11: #{tpu_custom_call.1} parent=5 // pred_region
        %s213 = ssub.s32 %s16, 1
        // Predicated region
        $region13: #{tpu_custom_call.1} parent=11 // pred_check
          %p214 = pneg %p49
        $region14: #{tpu_custom_call.1} parent=11 // pred_check_branch
          %216 = sbr.rel (%p214) target = $region16
        $region15: #{tpu_custom_call.1} parent=11 // pred_region
          %s218 = ssub.s32 16, 16
          %219 = vsyncadd [#allocation4], %s218
          %s221 = sshll.u32 %s0, 4
          %s222 = int_to_ptr.vmem [resolvable:$true] %s221
          %224 = dma.vmem_to_smem %s222, 16, [#allocation2], [#allocation4]
        $region16: #{tpu_custom_call.1} parent=11 // pred_fallthru
          _
        // Predicated region
        $region17: #{tpu_custom_call.1} parent=11 // pred_check
          %p225 = pneg %p70
        $region18: #{tpu_custom_call.1} parent=11 // pred_check_branch
          %227 = sbr.rel (%p225) target = $region20
        $region19: #{tpu_custom_call.1} parent=11 // pred_region
          _
        $region20: #{tpu_custom_call.1} parent=11 // pred_fallthru
          _
        // Predicated region
        $region21: #{tpu_custom_call.1} parent=11 // pred_check
          %p228 = pneg %p171
        $region22: #{tpu_custom_call.1} parent=11 // pred_check_branch
          %230 = sbr.rel (%p228) target = $region24
        $region23: #{tpu_custom_call.1} parent=11 // pred_region
          _
        $region24: #{tpu_custom_call.1} parent=11 // pred_fallthru
          _
      $region12: #{tpu_custom_call.1} parent=5 // pred_fallthru
        _
      %p231 = scmp.lt.s32.totalorder %s16, 2
      // Predicated region
      $region25: #{tpu_custom_call.1} parent=5 // pred_check
        %p232 = pneg %p231
      $region26: #{tpu_custom_call.1} parent=5 // pred_check_branch
        %234 = sbr.rel (%p232) target = $region28
      $region27: #{tpu_custom_call.1} parent=5 // pred_region
        // Predicated region
        $region29: #{tpu_custom_call.1} parent=27 // pred_check
          %p235 = pneg %p90
        $region30: #{tpu_custom_call.1} parent=27 // pred_check_branch
          %237 = sbr.rel (%p235) target = $region32
        $region31: #{tpu_custom_call.1} parent=27 // pred_region
          %p238 = scmp.lt.s32.totalorder %s23, 1
          %s239 = scalar_select %p238, %s23, 1
          %s240 = smul.addr %s239, 4
          %s241 = scalar_lea.vmem %s2, %s240
        $region32: #{tpu_custom_call.1} parent=27 // pred_fallthru
          _
        // Predicated region
        $region33: #{tpu_custom_call.1} parent=27 // pred_check
          %p242 = pneg %p116
        $region34: #{tpu_custom_call.1} parent=27 // pred_check_branch
          %244 = sbr.rel (%p242) target = $region36
        $region35: #{tpu_custom_call.1} parent=27 // pred_region
          %p245 = scmp.lt.s32.totalorder %s23, 1
          %s246 = scalar_select %p245, %s23, 1
          %s247 = smul.addr %s246, 4
          %s248 = scalar_lea.vmem %s3, %s247
        $region36: #{tpu_custom_call.1} parent=27 // pred_fallthru
          _
        // Predicated region
        $region37: #{tpu_custom_call.1} parent=27 // pred_check
          %p249 = pneg %p144
        $region38: #{tpu_custom_call.1} parent=27 // pred_check_branch
          %251 = sbr.rel (%p249) target = $region40
        $region39: #{tpu_custom_call.1} parent=27 // pred_region
          %s252 = smul.u32 16, %s24
          %p253 = scmp.lt.s32.totalorder %s23, 1
          %s254 = scalar_select %p253, %s23, 1
          %p255 = scmp.lt.s32.totalorder %s252, 15
          %s256 = scalar_select %p255, %s252, 15
          %s257 = smul.addr %s254, 16
          %s258 = sadd.s32 %s256, %s257
          %s259 = smul.addr %s258, 8
          %s260 = scalar_lea.vmem %s4, %s259
          %s261 = smul.u32 16, %s24
        $region40: #{tpu_custom_call.1} parent=27 // pred_fallthru
          _
      $region28: #{tpu_custom_call.1} parent=5 // pred_fallthru
        _
      %p262 = scmp.le.s32.totalorder 1, %s16
      %p263 = scmp.lt.s32.totalorder %s16, 3
      %p264 = pnand %p262, %p263
      %p265 = pneg %p264
      // Predicated region
      $region41: #{tpu_custom_call.1} parent=5 // pred_check
        _
      $region42: #{tpu_custom_call.1} parent=5 // pred_check_branch
        %267 = sbr.rel (%p264) target = $region44
      $region43: #{tpu_custom_call.1} parent=5 // pred_region
        %s268 = ssub.s32 %s16, 1
        // Predicated region
        $region45: #{tpu_custom_call.1} parent=43 // pred_check
          %p269 = pneg %p49
        $region46: #{tpu_custom_call.1} parent=43 // pred_check_branch
          %271 = sbr.rel (%p269) target = $region48
        $region47: #{tpu_custom_call.1} parent=43 // pred_region
          %272 = dma.done [#allocation4], 16
        $region48: #{tpu_custom_call.1} parent=43 // pred_fallthru
          _
        %273 = sfence
        %p274 = pneg %p49
        %p275 = pneg %p46
        %p276 = pneg %p70
        %p277 = pneg %p67
        %p278 = scmp.lt.s32.totalorder %s25, 1
        %s279 = scalar_select %p278, %s25, 1
        %s280 = smul.addr %s279, 4
        %s281 = scalar_lea.vmem %s2, %s280
        %p282 = pneg %p96
        %p283 = pneg %p93
        %p284 = scmp.lt.s32.totalorder %s25, 1
        %s285 = scalar_select %p284, %s25, 1
        %s286 = smul.addr %s285, 4
        %s287 = scalar_lea.vmem %s3, %s286
        %p288 = pneg %p122
        %p289 = pneg %p119
        %s290 = smul.u32 16, %s26
        %p291 = scmp.lt.s32.totalorder %s25, 1
        %s292 = scalar_select %p291, %s25, 1
        %p293 = scmp.lt.s32.totalorder %s290, 15
        %s294 = scalar_select %p293, %s290, 15
        %s295 = smul.addr %s292, 16
        %s296 = sadd.s32 %s294, %s295
        %s297 = smul.addr %s296, 8
        %s298 = scalar_lea.vmem %s4, %s297
        %p299 = pneg %p150
        %p300 = pneg %p147
        %p301 = pneg %p171
        %p302 = pneg %p168
        %p303 = pneg %p199
        %p304 = pneg %p196
        %s305 = sand.u32 %s186, 1
        %s306 = scalar_lea.sflag [#allocation3], %s305
        %s307 = sand.u32 %s186, 1
        %s308 = scalar_lea.vmem [#allocation5], %s307
        %p309 = scmp.lt.s32.totalorder %s25, 1
        %s310 = scalar_select %p309, %s25, 1
        %s311 = smul.addr %s310, 4
        %s312 = scalar_lea.vmem %s2, %s311
        %p313 = scmp.lt.s32.totalorder %s25, 1
        %s314 = scalar_select %p313, %s25, 1
        %s315 = smul.addr %s314, 4
        %s316 = scalar_lea.vmem %s3, %s315
        %s317 = smul.u32 16, %s26
        %p318 = scmp.lt.s32.totalorder %s25, 1
        %s319 = scalar_select %p318, %s25, 1
        %p320 = scmp.lt.s32.totalorder %s317, 15
        %s321 = scalar_select %p320, %s317, 15
        %s322 = smul.addr %s319, 16
        %s323 = sadd.s32 %s321, %s322
        %s324 = smul.addr %s323, 8
        %s325 = scalar_lea.vmem %s4, %s324
        %s326 = smul.u32 16, %s26
        %s327 = sld [smem:[#allocation2 + $0x9]]
        %v328 = vld [vmem:[%s1] sm:$0x1]
        %v329 = vld [vmem:[%s312] sm:$0x1]
        %v330 = vld [vmem:[%s312 + $0x1] sm:$0x1]
        %v331 = vld [vmem:[%s312 + $0x2] sm:$0x1]
        %p332 = scmp.eq.s32.totalorder %s26, 0
        %s333 = scalar_select %p332, 1.0, 0.0
        %v334 = vmul.f32 %v329, %v330
        %v335 = vmul.f32 %v334, %v328
        %vm336 = vcmask 1040384
        %v337 = vsel %vm336, %v335, 0.0
        %338 = vadd.xlane.f32.xlu0 %v337
        %v339 = vpop.xlane.xlu0 %338
        %v340 = vrot.slane %v339, 4
        %v341 = vadd.f32 %v339, %v340
        %v342 = vrot.slane %v341, 2
        %v343 = vadd.f32 %v341, %v342
        %v344 = vrot.slane %v343, 1
        %v345 = vadd.f32 %v343, %v344
        %s346 = vtos %v345
        %s347 = smul.f32 %s333, %s346
        %s348 = smul.f32 %s347, %s327
        %v349 = vmul.f32 %v329, %v331
        %v350 = vmul.f32 %v349, %v328
        %v351 = vsel %vm336, %v350, 0.0
        %352 = vadd.xlane.f32.xlu0 %v351
        %v353 = vpop.xlane.xlu0 %352
        %v354 = vrot.slane %v353, 4
        %v355 = vadd.f32 %v353, %v354
        %v356 = vrot.slane %v355, 2
        %v357 = vadd.f32 %v355, %v356
        %v358 = vrot.slane %v357, 1
        %v359 = vadd.f32 %v357, %v358
        %s360 = vtos %v359
        %s361 = smul.f32 %s333, %s360
        %s362 = smul.f32 %s361, %s327
        %v363 = vmul.f32 %v330, %v331
        %v364 = vmul.f32 %v363, %v328
        %v365 = vsel %vm336, %v364, 0.0
        %366 = vadd.xlane.f32.xlu0 %v365
        %v367 = vpop.xlane.xlu0 %366
        %v368 = vrot.slane %v367, 4
        %v369 = vadd.f32 %v367, %v368
        %v370 = vrot.slane %v369, 2
        %v371 = vadd.f32 %v369, %v370
        %v372 = vrot.slane %v371, 1
        %v373 = vadd.f32 %v371, %v372
        %s374 = vtos %v373
        %s375 = smul.f32 %s333, %s374
        %s376 = smul.f32 %s375, %s327
        %s377 = sld [smem:[#allocation2]]
        %s378 = sld [smem:[#allocation2 + $0x1]]
        %s379 = sld [smem:[#allocation2 + $0x2]]
        %s380 = sld [smem:[#allocation2 + $0x3]]
        %s381 = sld [smem:[#allocation2 + $0x4]]
        %s382 = sld [smem:[#allocation2 + $0x5]]
        %s383 = sld [smem:[#allocation2 + $0x6]]
        %s384 = sld [smem:[#allocation2 + $0x7]]
        %s385 = sld [smem:[#allocation2 + $0x8]]
        %s386 = sld [smem:[#allocation2 + $0xa]]
        %s387 = sld [smem:[#allocation2 + $0xb]]
        %s388 = sld [smem:[#allocation2 + $0xc]]
        %v389 = vld [vmem:[%s325] sm:$0xff]
        %v390 = vld [vmem:[%s325 + $0x8] sm:$0xff]
        %v391 = vld [vmem:[%s325 + $0x10] sm:$0xff]
        %v392 = vld [vmem:[%s325 + $0x18] sm:$0xff]
        %v393 = vld [vmem:[%s325 + $0x20] sm:$0xff]
        %v394 = vld [vmem:[%s325 + $0x28] sm:$0xff]
        %v395 = vld [vmem:[%s325 + $0x30] sm:$0xff]
        %v396 = vld [vmem:[%s325 + $0x38] sm:$0xff]
        %v397 = vld [vmem:[%s325 + $0x40] sm:$0xff]
        %v398 = vld [vmem:[%s325 + $0x48] sm:$0xff]
        %v399 = vld [vmem:[%s325 + $0x50] sm:$0xff]
        %v400 = vld [vmem:[%s325 + $0x58] sm:$0xff]
        %v401 = vld [vmem:[%s325 + $0x60] sm:$0xff]
        %v402 = vld [vmem:[%s325 + $0x68] sm:$0xff]
        %v403 = vld [vmem:[%s325 + $0x70] sm:$0xff]
        %v404 = vld [vmem:[%s325 + $0x78] sm:$0xff]
        %s405 = smul.u32 %s26, 128
        %s406 = sshra.s32 %s405, 7
        %s407 = sand.u32 %s405, 127
        %s408 = scalar_lea.vmem %s316, %s406
        %v409 = vld [vmem:[%s408] sm:$0x7]
        %s410 = scalar_lea.vmem %s5, %s406
        %v411 = vld [vmem:[%s410] sm:$0x1]
        %v412 = vlaneseq
        %v413 = vshrl.u32 %v412, 7
        %v414 = vsub.s32 0, %v413
        %v415 = vrot.slane %v409, %v414
        %417 = vset.pattern.permute.xlu0 0
        %418 = vperm.xlu0 %417, %v389
        %v419 = vpop.permute.xlu0 %418
        %422 = vset.pattern.permute.xlu0 0
        %423 = vperm.xlu0 %422, %v390
        %v424 = vpop.permute.xlu0 %423
        %427 = vset.pattern.permute.xlu0 0
        %428 = vperm.xlu0 %427, %v391
        %v429 = vpop.permute.xlu0 %428
        %432 = vset.pattern.permute.xlu0 0
        %433 = vperm.xlu0 %432, %v392
        %v434 = vpop.permute.xlu0 %433
        %437 = vset.pattern.permute.xlu0 0
        %438 = vperm.xlu0 %437, %v393
        %v439 = vpop.permute.xlu0 %438
        %442 = vset.pattern.permute.xlu0 0
        %443 = vperm.xlu0 %442, %v394
        %v444 = vpop.permute.xlu0 %443
        %447 = vset.pattern.permute.xlu0 0
        %448 = vperm.xlu0 %447, %v395
        %v449 = vpop.permute.xlu0 %448
        %452 = vset.pattern.permute.xlu0 0
        %453 = vperm.xlu0 %452, %v396
        %v454 = vpop.permute.xlu0 %453
        %457 = vset.pattern.permute.xlu0 0
        %458 = vperm.xlu0 %457, %v397
        %v459 = vpop.permute.xlu0 %458
        %462 = vset.pattern.permute.xlu0 0
        %463 = vperm.xlu0 %462, %v398
        %v464 = vpop.permute.xlu0 %463
        %467 = vset.pattern.permute.xlu0 0
        %468 = vperm.xlu0 %467, %v399
        %v469 = vpop.permute.xlu0 %468
        %472 = vset.pattern.permute.xlu0 0
        %473 = vperm.xlu0 %472, %v400
        %v474 = vpop.permute.xlu0 %473
        %477 = vset.pattern.permute.xlu0 0
        %478 = vperm.xlu0 %477, %v401
        %v479 = vpop.permute.xlu0 %478
        %482 = vset.pattern.permute.xlu0 0
        %483 = vperm.xlu0 %482, %v402
        %v484 = vpop.permute.xlu0 %483
        %487 = vset.pattern.permute.xlu0 0
        %488 = vperm.xlu0 %487, %v403
        %v489 = vpop.permute.xlu0 %488
        %492 = vset.pattern.permute.xlu0 0
        %493 = vperm.xlu0 %492, %v404
        %v494 = vpop.permute.xlu0 %493
        %v496 = vsub.f32 %v415, %v419
        %v497 = vsub.f32 %v415, %v424
        %v498 = vsub.f32 %v415, %v429
        %v499 = vsub.f32 %v415, %v434
        %v500 = vsub.f32 %v415, %v439
        %v501 = vsub.f32 %v415, %v444
        %v502 = vsub.f32 %v415, %v449
        %v503 = vsub.f32 %v415, %v454
        %v504 = vsub.f32 %v415, %v459
        %v505 = vsub.f32 %v415, %v464
        %v506 = vsub.f32 %v415, %v469
        %v507 = vsub.f32 %v415, %v474
        %v508 = vsub.f32 %v415, %v479
        %v509 = vsub.f32 %v415, %v484
        %v510 = vsub.f32 %v415, %v489
        %v511 = vsub.f32 %v415, %v494
        %v512 = vstv %s380
        %v513 = vadd.f32 %v496, %v512
        %v514 = vadd.f32 %v497, %v512
        %v515 = vadd.f32 %v498, %v512
        %v516 = vadd.f32 %v499, %v512
        %v517 = vadd.f32 %v500, %v512
        %v518 = vadd.f32 %v501, %v512
        %v519 = vadd.f32 %v502, %v512
        %v520 = vadd.f32 %v503, %v512
        %v521 = vadd.f32 %v504, %v512
        %v522 = vadd.f32 %v505, %v512
        %v523 = vadd.f32 %v506, %v512
        %v524 = vadd.f32 %v507, %v512
        %v525 = vadd.f32 %v508, %v512
        %v526 = vadd.f32 %v509, %v512
        %v527 = vadd.f32 %v510, %v512
        %v528 = vadd.f32 %v511, %v512
        %v529 = vstv %s383
        %v530 = vmul.f32 %v513, %v529
        %v531 = vmul.f32 %v514, %v529
        %v532 = vmul.f32 %v515, %v529
        %v533 = vmul.f32 %v516, %v529
        %v534 = vmul.f32 %v517, %v529
        %v535 = vmul.f32 %v518, %v529
        %v536 = vmul.f32 %v519, %v529
        %v537 = vmul.f32 %v520, %v529
        %v538 = vmul.f32 %v521, %v529
        %v539 = vmul.f32 %v522, %v529
        %v540 = vmul.f32 %v523, %v529
        %v541 = vmul.f32 %v524, %v529
        %v542 = vmul.f32 %v525, %v529
        %v543 = vmul.f32 %v526, %v529
        %v544 = vmul.f32 %v527, %v529
        %v545 = vmul.f32 %v528, %v529
        %v546 = vfloor.f32 %v530
        %v547 = vfloor.f32 %v531
        %v548 = vfloor.f32 %v532
        %v549 = vfloor.f32 %v533
        %v550 = vfloor.f32 %v534
        %v551 = vfloor.f32 %v535
        %v552 = vfloor.f32 %v536
        %v553 = vfloor.f32 %v537
        %v554 = vfloor.f32 %v538
        %v555 = vfloor.f32 %v539
        %v556 = vfloor.f32 %v540
        %v557 = vfloor.f32 %v541
        %v558 = vfloor.f32 %v542
        %v559 = vfloor.f32 %v543
        %v560 = vfloor.f32 %v544
        %v561 = vfloor.f32 %v545
        %v562 = vstv %s377
        %v563 = vmul.f32 %v546, %v562
        %v564 = vmul.f32 %v547, %v562
        %v565 = vmul.f32 %v548, %v562
        %v566 = vmul.f32 %v549, %v562
        %v567 = vmul.f32 %v550, %v562
        %v568 = vmul.f32 %v551, %v562
        %v569 = vmul.f32 %v552, %v562
        %v570 = vmul.f32 %v553, %v562
        %v571 = vmul.f32 %v554, %v562
        %v572 = vmul.f32 %v555, %v562
        %v573 = vmul.f32 %v556, %v562
        %v574 = vmul.f32 %v557, %v562
        %v575 = vmul.f32 %v558, %v562
        %v576 = vmul.f32 %v559, %v562
        %v577 = vmul.f32 %v560, %v562
        %v578 = vmul.f32 %v561, %v562
        %v579 = vsub.f32 %v496, %v563
        %v580 = vsub.f32 %v497, %v564
        %v581 = vsub.f32 %v498, %v565
        %v582 = vsub.f32 %v499, %v566
        %v583 = vsub.f32 %v500, %v567
        %v584 = vsub.f32 %v501, %v568
        %v585 = vsub.f32 %v502, %v569
        %v586 = vsub.f32 %v503, %v570
        %v587 = vsub.f32 %v504, %v571
        %v588 = vsub.f32 %v505, %v572
        %v589 = vsub.f32 %v506, %v573
        %v590 = vsub.f32 %v507, %v574
        %v591 = vsub.f32 %v508, %v575
        %v592 = vsub.f32 %v509, %v576
        %v593 = vsub.f32 %v510, %v577
        %v594 = vsub.f32 %v511, %v578
        %v595 = vlaneseq
        %v596 = vshrl.u32 %v595, 7
        %v597 = vsub.s32 1, %v596
        %v598 = vrot.slane %v409, %v597
        %599 = vset.pattern.permute.xlu0 1
        %600 = vperm.xlu0 %599, %v389
        %v601 = vpop.permute.xlu0 %600
        %603 = vset.pattern.permute.xlu0 1
        %604 = vperm.xlu0 %603, %v390
        %v605 = vpop.permute.xlu0 %604
        %607 = vset.pattern.permute.xlu0 1
        %608 = vperm.xlu0 %607, %v391
        %v609 = vpop.permute.xlu0 %608
        %611 = vset.pattern.permute.xlu0 1
        %612 = vperm.xlu0 %611, %v392
        %v613 = vpop.permute.xlu0 %612
        %615 = vset.pattern.permute.xlu0 1
        %616 = vperm.xlu0 %615, %v393
        %v617 = vpop.permute.xlu0 %616
        %619 = vset.pattern.permute.xlu0 1
        %620 = vperm.xlu0 %619, %v394
        %v621 = vpop.permute.xlu0 %620
        %623 = vset.pattern.permute.xlu0 1
        %624 = vperm.xlu0 %623, %v395
        %v625 = vpop.permute.xlu0 %624
        %627 = vset.pattern.permute.xlu0 1
        %628 = vperm.xlu0 %627, %v396
        %v629 = vpop.permute.xlu0 %628
        %631 = vset.pattern.permute.xlu0 1
        %632 = vperm.xlu0 %631, %v397
        %v633 = vpop.permute.xlu0 %632
        %635 = vset.pattern.permute.xlu0 1
        %636 = vperm.xlu0 %635, %v398
        %v637 = vpop.permute.xlu0 %636
        %639 = vset.pattern.permute.xlu0 1
        %640 = vperm.xlu0 %639, %v399
        %v641 = vpop.permute.xlu0 %640
        %643 = vset.pattern.permute.xlu0 1
        %644 = vperm.xlu0 %643, %v400
        %v645 = vpop.permute.xlu0 %644
        %647 = vset.pattern.permute.xlu0 1
        %648 = vperm.xlu0 %647, %v401
        %v649 = vpop.permute.xlu0 %648
        %651 = vset.pattern.permute.xlu0 1
        %652 = vperm.xlu0 %651, %v402
        %v653 = vpop.permute.xlu0 %652
        %655 = vset.pattern.permute.xlu0 1
        %656 = vperm.xlu0 %655, %v403
        %v657 = vpop.permute.xlu0 %656
        %659 = vset.pattern.permute.xlu0 1
        %660 = vperm.xlu0 %659, %v404
        %v661 = vpop.permute.xlu0 %660
        %v663 = vsub.f32 %v598, %v601
        %v664 = vsub.f32 %v598, %v605
        %v665 = vsub.f32 %v598, %v609
        %v666 = vsub.f32 %v598, %v613
        %v667 = vsub.f32 %v598, %v617
        %v668 = vsub.f32 %v598, %v621
        %v669 = vsub.f32 %v598, %v625
        %v670 = vsub.f32 %v598, %v629
        %v671 = vsub.f32 %v598, %v633
        %v672 = vsub.f32 %v598, %v637
        %v673 = vsub.f32 %v598, %v641
        %v674 = vsub.f32 %v598, %v645
        %v675 = vsub.f32 %v598, %v649
        %v676 = vsub.f32 %v598, %v653
        %v677 = vsub.f32 %v598, %v657
        %v678 = vsub.f32 %v598, %v661
        %v679 = vstv %s381
        %v680 = vadd.f32 %v663, %v679
        %v681 = vadd.f32 %v664, %v679
        %v682 = vadd.f32 %v665, %v679
        %v683 = vadd.f32 %v666, %v679
        %v684 = vadd.f32 %v667, %v679
        %v685 = vadd.f32 %v668, %v679
        %v686 = vadd.f32 %v669, %v679
        %v687 = vadd.f32 %v670, %v679
        %v688 = vadd.f32 %v671, %v679
        %v689 = vadd.f32 %v672, %v679
        %v690 = vadd.f32 %v673, %v679
        %v691 = vadd.f32 %v674, %v679
        %v692 = vadd.f32 %v675, %v679
        %v693 = vadd.f32 %v676, %v679
        %v694 = vadd.f32 %v677, %v679
        %v695 = vadd.f32 %v678, %v679
        %v696 = vstv %s384
        %v697 = vmul.f32 %v680, %v696
        %v698 = vmul.f32 %v681, %v696
        %v699 = vmul.f32 %v682, %v696
        %v700 = vmul.f32 %v683, %v696
        %v701 = vmul.f32 %v684, %v696
        %v702 = vmul.f32 %v685, %v696
        %v703 = vmul.f32 %v686, %v696
        %v704 = vmul.f32 %v687, %v696
        %v705 = vmul.f32 %v688, %v696
        %v706 = vmul.f32 %v689, %v696
        %v707 = vmul.f32 %v690, %v696
        %v708 = vmul.f32 %v691, %v696
        %v709 = vmul.f32 %v692, %v696
        %v710 = vmul.f32 %v693, %v696
        %v711 = vmul.f32 %v694, %v696
        %v712 = vmul.f32 %v695, %v696
        %v713 = vfloor.f32 %v697
        %v714 = vfloor.f32 %v698
        %v715 = vfloor.f32 %v699
        %v716 = vfloor.f32 %v700
        %v717 = vfloor.f32 %v701
        %v718 = vfloor.f32 %v702
        %v719 = vfloor.f32 %v703
        %v720 = vfloor.f32 %v704
        %v721 = vfloor.f32 %v705
        %v722 = vfloor.f32 %v706
        %v723 = vfloor.f32 %v707
        %v724 = vfloor.f32 %v708
        %v725 = vfloor.f32 %v709
        %v726 = vfloor.f32 %v710
        %v727 = vfloor.f32 %v711
        %v728 = vfloor.f32 %v712
        %v729 = vstv %s378
        %v730 = vmul.f32 %v713, %v729
        %v731 = vmul.f32 %v714, %v729
        %v732 = vmul.f32 %v715, %v729
        %v733 = vmul.f32 %v716, %v729
        %v734 = vmul.f32 %v717, %v729
        %v735 = vmul.f32 %v718, %v729
        %v736 = vmul.f32 %v719, %v729
        %v737 = vmul.f32 %v720, %v729
        %v738 = vmul.f32 %v721, %v729
        %v739 = vmul.f32 %v722, %v729
        %v740 = vmul.f32 %v723, %v729
        %v741 = vmul.f32 %v724, %v729
        %v742 = vmul.f32 %v725, %v729
        %v743 = vmul.f32 %v726, %v729
        %v744 = vmul.f32 %v727, %v729
        %v745 = vmul.f32 %v728, %v729
        %v746 = vsub.f32 %v663, %v730
        %v747 = vsub.f32 %v664, %v731
        %v748 = vsub.f32 %v665, %v732
        %v749 = vsub.f32 %v666, %v733
        %v750 = vsub.f32 %v667, %v734
        %v751 = vsub.f32 %v668, %v735
        %v752 = vsub.f32 %v669, %v736
        %v753 = vsub.f32 %v670, %v737
        %v754 = vsub.f32 %v671, %v738
        %v755 = vsub.f32 %v672, %v739
        %v756 = vsub.f32 %v673, %v740
        %v757 = vsub.f32 %v674, %v741
        %v758 = vsub.f32 %v675, %v742
        %v759 = vsub.f32 %v676, %v743
        %v760 = vsub.f32 %v677, %v744
        %v761 = vsub.f32 %v678, %v745
        %v762 = vlaneseq
        %v763 = vshrl.u32 %v762, 7
        %v764 = vsub.s32 2, %v763
        %v765 = vrot.slane %v409, %v764
        %766 = vset.pattern.permute.xlu0 2
        %767 = vperm.xlu0 %766, %v389
        %v768 = vpop.permute.xlu0 %767
        %770 = vset.pattern.permute.xlu0 2
        %771 = vperm.xlu0 %770, %v390
        %v772 = vpop.permute.xlu0 %771
        %774 = vset.pattern.permute.xlu0 2
        %775 = vperm.xlu0 %774, %v391
        %v776 = vpop.permute.xlu0 %775
        %778 = vset.pattern.permute.xlu0 2
        %779 = vperm.xlu0 %778, %v392
        %v780 = vpop.permute.xlu0 %779
        %782 = vset.pattern.permute.xlu0 2
        %783 = vperm.xlu0 %782, %v393
        %v784 = vpop.permute.xlu0 %783
        %786 = vset.pattern.permute.xlu0 2
        %787 = vperm.xlu0 %786, %v394
        %v788 = vpop.permute.xlu0 %787
        %790 = vset.pattern.permute.xlu0 2
        %791 = vperm.xlu0 %790, %v395
        %v792 = vpop.permute.xlu0 %791
        %794 = vset.pattern.permute.xlu0 2
        %795 = vperm.xlu0 %794, %v396
        %v796 = vpop.permute.xlu0 %795
        %798 = vset.pattern.permute.xlu0 2
        %799 = vperm.xlu0 %798, %v397
        %v800 = vpop.permute.xlu0 %799
        %802 = vset.pattern.permute.xlu0 2
        %803 = vperm.xlu0 %802, %v398
        %v804 = vpop.permute.xlu0 %803
        %806 = vset.pattern.permute.xlu0 2
        %807 = vperm.xlu0 %806, %v399
        %v808 = vpop.permute.xlu0 %807
        %810 = vset.pattern.permute.xlu0 2
        %811 = vperm.xlu0 %810, %v400
        %v812 = vpop.permute.xlu0 %811
        %814 = vset.pattern.permute.xlu0 2
        %815 = vperm.xlu0 %814, %v401
        %v816 = vpop.permute.xlu0 %815
        %818 = vset.pattern.permute.xlu0 2
        %819 = vperm.xlu0 %818, %v402
        %v820 = vpop.permute.xlu0 %819
        %822 = vset.pattern.permute.xlu0 2
        %823 = vperm.xlu0 %822, %v403
        %v824 = vpop.permute.xlu0 %823
        %826 = vset.pattern.permute.xlu0 2
        %827 = vperm.xlu0 %826, %v404
        %v828 = vpop.permute.xlu0 %827
        %v830 = vsub.f32 %v765, %v768
        %v831 = vsub.f32 %v765, %v772
        %v832 = vsub.f32 %v765, %v776
        %v833 = vsub.f32 %v765, %v780
        %v834 = vsub.f32 %v765, %v784
        %v835 = vsub.f32 %v765, %v788
        %v836 = vsub.f32 %v765, %v792
        %v837 = vsub.f32 %v765, %v796
        %v838 = vsub.f32 %v765, %v800
        %v839 = vsub.f32 %v765, %v804
        %v840 = vsub.f32 %v765, %v808
        %v841 = vsub.f32 %v765, %v812
        %v842 = vsub.f32 %v765, %v816
        %v843 = vsub.f32 %v765, %v820
        %v844 = vsub.f32 %v765, %v824
        %v845 = vsub.f32 %v765, %v828
        %v846 = vstv %s382
        %v847 = vadd.f32 %v830, %v846
        %v848 = vadd.f32 %v831, %v846
        %v849 = vadd.f32 %v832, %v846
        %v850 = vadd.f32 %v833, %v846
        %v851 = vadd.f32 %v834, %v846
        %v852 = vadd.f32 %v835, %v846
        %v853 = vadd.f32 %v836, %v846
        %v854 = vadd.f32 %v837, %v846
        %v855 = vadd.f32 %v838, %v846
        %v856 = vadd.f32 %v839, %v846
        %v857 = vadd.f32 %v840, %v846
        %v858 = vadd.f32 %v841, %v846
        %v859 = vadd.f32 %v842, %v846
        %v860 = vadd.f32 %v843, %v846
        %v861 = vadd.f32 %v844, %v846
        %v862 = vadd.f32 %v845, %v846
        %v863 = vstv %s385
        %v864 = vmul.f32 %v847, %v863
        %v865 = vmul.f32 %v848, %v863
        %v866 = vmul.f32 %v849, %v863
        %v867 = vmul.f32 %v850, %v863
        %v868 = vmul.f32 %v851, %v863
        %v869 = vmul.f32 %v852, %v863
        %v870 = vmul.f32 %v853, %v863
        %v871 = vmul.f32 %v854, %v863
        %v872 = vmul.f32 %v855, %v863
        %v873 = vmul.f32 %v856, %v863
        %v874 = vmul.f32 %v857, %v863
        %v875 = vmul.f32 %v858, %v863
        %v876 = vmul.f32 %v859, %v863
        %v877 = vmul.f32 %v860, %v863
        %v878 = vmul.f32 %v861, %v863
        %v879 = vmul.f32 %v862, %v863
        %v880 = vfloor.f32 %v864
        %v881 = vfloor.f32 %v865
        %v882 = vfloor.f32 %v866
        %v883 = vfloor.f32 %v867
        %v884 = vfloor.f32 %v868
        %v885 = vfloor.f32 %v869
        %v886 = vfloor.f32 %v870
        %v887 = vfloor.f32 %v871
        %v888 = vfloor.f32 %v872
        %v889 = vfloor.f32 %v873
        %v890 = vfloor.f32 %v874
        %v891 = vfloor.f32 %v875
        %v892 = vfloor.f32 %v876
        %v893 = vfloor.f32 %v877
        %v894 = vfloor.f32 %v878
        %v895 = vfloor.f32 %v879
        %v896 = vstv %s379
        %v897 = vmul.f32 %v880, %v896
        %v898 = vmul.f32 %v881, %v896
        %v899 = vmul.f32 %v882, %v896
        %v900 = vmul.f32 %v883, %v896
        %v901 = vmul.f32 %v884, %v896
        %v902 = vmul.f32 %v885, %v896
        %v903 = vmul.f32 %v886, %v896
        %v904 = vmul.f32 %v887, %v896
        %v905 = vmul.f32 %v888, %v896
        %v906 = vmul.f32 %v889, %v896
        %v907 = vmul.f32 %v890, %v896
        %v908 = vmul.f32 %v891, %v896
        %v909 = vmul.f32 %v892, %v896
        %v910 = vmul.f32 %v893, %v896
        %v911 = vmul.f32 %v894, %v896
        %v912 = vmul.f32 %v895, %v896
        %v913 = vsub.f32 %v830, %v897
        %v914 = vsub.f32 %v831, %v898
        %v915 = vsub.f32 %v832, %v899
        %v916 = vsub.f32 %v833, %v900
        %v917 = vsub.f32 %v834, %v901
        %v918 = vsub.f32 %v835, %v902
        %v919 = vsub.f32 %v836, %v903
        %v920 = vsub.f32 %v837, %v904
        %v921 = vsub.f32 %v838, %v905
        %v922 = vsub.f32 %v839, %v906
        %v923 = vsub.f32 %v840, %v907
        %v924 = vsub.f32 %v841, %v908
        %v925 = vsub.f32 %v842, %v909
        %v926 = vsub.f32 %v843, %v910
        %v927 = vsub.f32 %v844, %v911
        %v928 = vsub.f32 %v845, %v912
        %v929 = vmul.f32 %v579, %v579
        %v930 = vmul.f32 %v580, %v580
        %v931 = vmul.f32 %v581, %v581
        %v932 = vmul.f32 %v582, %v582
        %v933 = vmul.f32 %v583, %v583
        %v934 = vmul.f32 %v584, %v584
        %v935 = vmul.f32 %v585, %v585
        %v936 = vmul.f32 %v586, %v586
        %v937 = vmul.f32 %v587, %v587
        %v938 = vmul.f32 %v588, %v588
        %v939 = vmul.f32 %v589, %v589
        %v940 = vmul.f32 %v590, %v590
        %v941 = vmul.f32 %v591, %v591
        %v942 = vmul.f32 %v592, %v592
        %v943 = vmul.f32 %v593, %v593
        %v944 = vmul.f32 %v594, %v594
        %v945 = vmul.f32 %v746, %v746
        %v946 = vmul.f32 %v747, %v747
        %v947 = vmul.f32 %v748, %v748
        %v948 = vmul.f32 %v749, %v749
        %v949 = vmul.f32 %v750, %v750
        %v950 = vmul.f32 %v751, %v751
        %v951 = vmul.f32 %v752, %v752
        %v952 = vmul.f32 %v753, %v753
        %v953 = vmul.f32 %v754, %v754
        %v954 = vmul.f32 %v755, %v755
        %v955 = vmul.f32 %v756, %v756
        %v956 = vmul.f32 %v757, %v757
        %v957 = vmul.f32 %v758, %v758
        %v958 = vmul.f32 %v759, %v759
        %v959 = vmul.f32 %v760, %v760
        %v960 = vmul.f32 %v761, %v761
        %v961 = vadd.f32 %v929, %v945
        %v962 = vadd.f32 %v930, %v946
        %v963 = vadd.f32 %v931, %v947
        %v964 = vadd.f32 %v932, %v948
        %v965 = vadd.f32 %v933, %v949
        %v966 = vadd.f32 %v934, %v950
        %v967 = vadd.f32 %v935, %v951
        %v968 = vadd.f32 %v936, %v952
        %v969 = vadd.f32 %v937, %v953
        %v970 = vadd.f32 %v938, %v954
        %v971 = vadd.f32 %v939, %v955
        %v972 = vadd.f32 %v940, %v956
        %v973 = vadd.f32 %v941, %v957
        %v974 = vadd.f32 %v942, %v958
        %v975 = vadd.f32 %v943, %v959
        %v976 = vadd.f32 %v944, %v960
        %v977 = vmul.f32 %v913, %v913
        %v978 = vmul.f32 %v914, %v914
        %v979 = vmul.f32 %v915, %v915
        %v980 = vmul.f32 %v916, %v916
        %v981 = vmul.f32 %v917, %v917
        %v982 = vmul.f32 %v918, %v918
        %v983 = vmul.f32 %v919, %v919
        %v984 = vmul.f32 %v920, %v920
        %v985 = vmul.f32 %v921, %v921
        %v986 = vmul.f32 %v922, %v922
        %v987 = vmul.f32 %v923, %v923
        %v988 = vmul.f32 %v924, %v924
        %v989 = vmul.f32 %v925, %v925
        %v990 = vmul.f32 %v926, %v926
        %v991 = vmul.f32 %v927, %v927
        %v992 = vmul.f32 %v928, %v928
        %v993 = vadd.f32 %v961, %v977
        %v994 = vadd.f32 %v962, %v978
        %v995 = vadd.f32 %v963, %v979
        %v996 = vadd.f32 %v964, %v980
        %v997 = vadd.f32 %v965, %v981
        %v998 = vadd.f32 %v966, %v982
        %v999 = vadd.f32 %v967, %v983
        %v1000 = vadd.f32 %v968, %v984
        %v1001 = vadd.f32 %v969, %v985
        %v1002 = vadd.f32 %v970, %v986
        %v1003 = vadd.f32 %v971, %v987
        %v1004 = vadd.f32 %v972, %v988
        %v1005 = vadd.f32 %v973, %v989
        %v1006 = vadd.f32 %v974, %v990
        %v1007 = vadd.f32 %v975, %v991
        %v1008 = vadd.f32 %v976, %v992
        %v1010 = vlaneseq
        %v1011 = vshrl.u32 %v1010, 7
        %v1012 = vsub.s32 0, %v1011
        %v1013 = vrot.slane %v411, %v1012
        %vm1015 = vcmp.lt.f32.partialorder %v993, %v1013
        %vm1016 = vcmp.lt.f32.partialorder %v994, %v1013
        %vm1017 = vcmp.lt.f32.partialorder %v995, %v1013
        %vm1018 = vcmp.lt.f32.partialorder %v996, %v1013
        %vm1019 = vcmp.lt.f32.partialorder %v997, %v1013
        %vm1020 = vcmp.lt.f32.partialorder %v998, %v1013
        %vm1021 = vcmp.lt.f32.partialorder %v999, %v1013
        %vm1022 = vcmp.lt.f32.partialorder %v1000, %v1013
        %vm1023 = vcmp.lt.f32.partialorder %v1001, %v1013
        %vm1024 = vcmp.lt.f32.partialorder %v1002, %v1013
        %vm1025 = vcmp.lt.f32.partialorder %v1003, %v1013
        %vm1026 = vcmp.lt.f32.partialorder %v1004, %v1013
        %vm1027 = vcmp.lt.f32.partialorder %v1005, %v1013
        %vm1028 = vcmp.lt.f32.partialorder %v1006, %v1013
        %vm1029 = vcmp.lt.f32.partialorder %v1007, %v1013
        %vm1030 = vcmp.lt.f32.partialorder %v1008, %v1013
        %vm1031 = vcmp.ne.f32.partialorder %v993, 0.0
        %vm1032 = vcmp.ne.f32.partialorder %v994, 0.0
        %vm1033 = vcmp.ne.f32.partialorder %v995, 0.0
        %vm1034 = vcmp.ne.f32.partialorder %v996, 0.0
        %vm1035 = vcmp.ne.f32.partialorder %v997, 0.0
        %vm1036 = vcmp.ne.f32.partialorder %v998, 0.0
        %vm1037 = vcmp.ne.f32.partialorder %v999, 0.0
        %vm1038 = vcmp.ne.f32.partialorder %v1000, 0.0
        %vm1039 = vcmp.ne.f32.partialorder %v1001, 0.0
        %vm1040 = vcmp.ne.f32.partialorder %v1002, 0.0
        %vm1041 = vcmp.ne.f32.partialorder %v1003, 0.0
        %vm1042 = vcmp.ne.f32.partialorder %v1004, 0.0
        %vm1043 = vcmp.ne.f32.partialorder %v1005, 0.0
        %vm1044 = vcmp.ne.f32.partialorder %v1006, 0.0
        %vm1045 = vcmp.ne.f32.partialorder %v1007, 0.0
        %vm1046 = vcmp.ne.f32.partialorder %v1008, 0.0
        %vm1047 = vmand %vm1015, %vm1031
        %vm1048 = vmand %vm1016, %vm1032
        %vm1049 = vmand %vm1017, %vm1033
        %vm1050 = vmand %vm1018, %vm1034
        %vm1051 = vmand %vm1019, %vm1035
        %vm1052 = vmand %vm1020, %vm1036
        %vm1053 = vmand %vm1021, %vm1037
        %vm1054 = vmand %vm1022, %vm1038
        %vm1055 = vmand %vm1023, %vm1039
        %vm1056 = vmand %vm1024, %vm1040
        %vm1057 = vmand %vm1025, %vm1041
        %vm1058 = vmand %vm1026, %vm1042
        %vm1059 = vmand %vm1027, %vm1043
        %vm1060 = vmand %vm1028, %vm1044
        %vm1061 = vmand %vm1029, %vm1045
        %vm1062 = vmand %vm1030, %vm1046
        %v1063 = vlaneseq
        %v1064 = vshrl.u32 %v1063, 7
        %v1065 = vadd.s32 %v1064, 8
        %v1066 = vadd.s32 %v1064, 16
        %v1067 = vadd.s32 %v1064, 24
        %v1068 = vadd.s32 %v1064, 32
        %v1069 = vadd.s32 %v1064, 40
        %v1070 = vadd.s32 %v1064, 48
        %v1071 = vadd.s32 %v1064, 56
        %v1072 = vadd.s32 %v1064, 64
        %v1073 = vadd.s32 %v1064, 72
        %v1074 = vadd.s32 %v1064, 80
        %v1075 = vadd.s32 %v1064, 88
        %v1076 = vadd.s32 %v1064, 96
        %v1077 = vadd.s32 %v1064, 104
        %v1078 = vadd.s32 %v1064, 112
        %v1079 = vadd.s32 %v1064, 120
        %v1080 = vlaneseq
        %v1081 = vand.u32 %v1080, 127
        %vm1082 = vcmp.gt.s32.totalorder %v1081, %v1064
        %vm1083 = vcmp.gt.s32.totalorder %v1081, %v1065
        %vm1084 = vcmp.gt.s32.totalorder %v1081, %v1066
        %vm1085 = vcmp.gt.s32.totalorder %v1081, %v1067
        %vm1086 = vcmp.gt.s32.totalorder %v1081, %v1068
        %vm1087 = vcmp.gt.s32.totalorder %v1081, %v1069
        %vm1088 = vcmp.gt.s32.totalorder %v1081, %v1070
        %vm1089 = vcmp.gt.s32.totalorder %v1081, %v1071
        %vm1090 = vcmp.gt.s32.totalorder %v1081, %v1072
        %vm1091 = vcmp.gt.s32.totalorder %v1081, %v1073
        %vm1092 = vcmp.gt.s32.totalorder %v1081, %v1074
        %vm1093 = vcmp.gt.s32.totalorder %v1081, %v1075
        %vm1094 = vcmp.gt.s32.totalorder %v1081, %v1076
        %vm1095 = vcmp.gt.s32.totalorder %v1081, %v1077
        %vm1096 = vcmp.gt.s32.totalorder %v1081, %v1078
        %vm1097 = vcmp.gt.s32.totalorder %v1081, %v1079
        %vm1098 = vmand %vm1047, %vm1082
        %vm1099 = vmand %vm1048, %vm1083
        %vm1100 = vmand %vm1049, %vm1084
        %vm1101 = vmand %vm1050, %vm1085
        %vm1102 = vmand %vm1051, %vm1086
        %vm1103 = vmand %vm1052, %vm1087
        %vm1104 = vmand %vm1053, %vm1088
        %vm1105 = vmand %vm1054, %vm1089
        %vm1106 = vmand %vm1055, %vm1090
        %vm1107 = vmand %vm1056, %vm1091
        %vm1108 = vmand %vm1057, %vm1092
        %vm1109 = vmand %vm1058, %vm1093
        %vm1110 = vmand %vm1059, %vm1094
        %vm1111 = vmand %vm1060, %vm1095
        %vm1112 = vmand %vm1061, %vm1096
        %vm1113 = vmand %vm1062, %vm1097
        %v1114 = vrcp.pop %v993
        %v1115 = vrcp.pop %v994
        %v1116 = vrcp.pop %v995
        %v1117 = vrcp.pop %v996
        %v1118 = vrcp.pop %v997
        %v1119 = vrcp.pop %v998
        %v1120 = vrcp.pop %v999
        %v1121 = vrcp.pop %v1000
        %v1122 = vrcp.pop %v1001
        %v1123 = vrcp.pop %v1002
        %v1124 = vrcp.pop %v1003
        %v1125 = vrcp.pop %v1004
        %v1126 = vrcp.pop %v1005
        %v1127 = vrcp.pop %v1006
        %v1128 = vrcp.pop %v1007
        %v1129 = vrcp.pop %v1008
        %v1130 = vmul.f32 %v993, %v1114
        %v1131 = vmul.f32 %v994, %v1115
        %v1132 = vmul.f32 %v995, %v1116
        %v1133 = vmul.f32 %v996, %v1117
        %v1134 = vmul.f32 %v997, %v1118
        %v1135 = vmul.f32 %v998, %v1119
        %v1136 = vmul.f32 %v999, %v1120
        %v1137 = vmul.f32 %v1000, %v1121
        %v1138 = vmul.f32 %v1001, %v1122
        %v1139 = vmul.f32 %v1002, %v1123
        %v1140 = vmul.f32 %v1003, %v1124
        %v1141 = vmul.f32 %v1004, %v1125
        %v1142 = vmul.f32 %v1005, %v1126
        %v1143 = vmul.f32 %v1006, %v1127
        %v1144 = vmul.f32 %v1007, %v1128
        %v1145 = vmul.f32 %v1008, %v1129
        %v1146 = vsub.f32 2.0, %v1130
        %v1147 = vsub.f32 2.0, %v1131
        %v1148 = vsub.f32 2.0, %v1132
        %v1149 = vsub.f32 2.0, %v1133
        %v1150 = vsub.f32 2.0, %v1134
        %v1151 = vsub.f32 2.0, %v1135
        %v1152 = vsub.f32 2.0, %v1136
        %v1153 = vsub.f32 2.0, %v1137
        %v1154 = vsub.f32 2.0, %v1138
        %v1155 = vsub.f32 2.0, %v1139
        %v1156 = vsub.f32 2.0, %v1140
        %v1157 = vsub.f32 2.0, %v1141
        %v1158 = vsub.f32 2.0, %v1142
        %v1159 = vsub.f32 2.0, %v1143
        %v1160 = vsub.f32 2.0, %v1144
        %v1161 = vsub.f32 2.0, %v1145
        %v1162 = vmul.f32 %v1114, %v1146
        %v1163 = vmul.f32 %v1115, %v1147
        %v1164 = vmul.f32 %v1116, %v1148
        %v1165 = vmul.f32 %v1117, %v1149
        %v1166 = vmul.f32 %v1118, %v1150
        %v1167 = vmul.f32 %v1119, %v1151
        %v1168 = vmul.f32 %v1120, %v1152
        %v1169 = vmul.f32 %v1121, %v1153
        %v1170 = vmul.f32 %v1122, %v1154
        %v1171 = vmul.f32 %v1123, %v1155
        %v1172 = vmul.f32 %v1124, %v1156
        %v1173 = vmul.f32 %v1125, %v1157
        %v1174 = vmul.f32 %v1126, %v1158
        %v1175 = vmul.f32 %v1127, %v1159
        %v1176 = vmul.f32 %v1128, %v1160
        %v1177 = vmul.f32 %v1129, %v1161
        %v1178 = vstv %s387
        %v1179 = vmul.f32 %v1178, %v1162
        %v1180 = vmul.f32 %v1178, %v1163
        %v1181 = vmul.f32 %v1178, %v1164
        %v1182 = vmul.f32 %v1178, %v1165
        %v1183 = vmul.f32 %v1178, %v1166
        %v1184 = vmul.f32 %v1178, %v1167
        %v1185 = vmul.f32 %v1178, %v1168
        %v1186 = vmul.f32 %v1178, %v1169
        %v1187 = vmul.f32 %v1178, %v1170
        %v1188 = vmul.f32 %v1178, %v1171
        %v1189 = vmul.f32 %v1178, %v1172
        %v1190 = vmul.f32 %v1178, %v1173
        %v1191 = vmul.f32 %v1178, %v1174
        %v1192 = vmul.f32 %v1178, %v1175
        %v1193 = vmul.f32 %v1178, %v1176
        %v1194 = vmul.f32 %v1178, %v1177
        %v1195 = vmul.f32 %v1179, %v1179
        %v1196 = vmul.f32 %v1180, %v1180
        %v1197 = vmul.f32 %v1181, %v1181
        %v1198 = vmul.f32 %v1182, %v1182
        %v1199 = vmul.f32 %v1183, %v1183
        %v1200 = vmul.f32 %v1184, %v1184
        %v1201 = vmul.f32 %v1185, %v1185
        %v1202 = vmul.f32 %v1186, %v1186
        %v1203 = vmul.f32 %v1187, %v1187
        %v1204 = vmul.f32 %v1188, %v1188
        %v1205 = vmul.f32 %v1189, %v1189
        %v1206 = vmul.f32 %v1190, %v1190
        %v1207 = vmul.f32 %v1191, %v1191
        %v1208 = vmul.f32 %v1192, %v1192
        %v1209 = vmul.f32 %v1193, %v1193
        %v1210 = vmul.f32 %v1194, %v1194
        %v1211 = vmul.f32 %v1195, %v1179
        %v1212 = vmul.f32 %v1196, %v1180
        %v1213 = vmul.f32 %v1197, %v1181
        %v1214 = vmul.f32 %v1198, %v1182
        %v1215 = vmul.f32 %v1199, %v1183
        %v1216 = vmul.f32 %v1200, %v1184
        %v1217 = vmul.f32 %v1201, %v1185
        %v1218 = vmul.f32 %v1202, %v1186
        %v1219 = vmul.f32 %v1203, %v1187
        %v1220 = vmul.f32 %v1204, %v1188
        %v1221 = vmul.f32 %v1205, %v1189
        %v1222 = vmul.f32 %v1206, %v1190
        %v1223 = vmul.f32 %v1207, %v1191
        %v1224 = vmul.f32 %v1208, %v1192
        %v1225 = vmul.f32 %v1209, %v1193
        %v1226 = vmul.f32 %v1210, %v1194
        %v1227 = vmul.f32 %v1211, 2.0
        %v1228 = vmul.f32 %v1212, 2.0
        %v1229 = vmul.f32 %v1213, 2.0
        %v1230 = vmul.f32 %v1214, 2.0
        %v1231 = vmul.f32 %v1215, 2.0
        %v1232 = vmul.f32 %v1216, 2.0
        %v1233 = vmul.f32 %v1217, 2.0
        %v1234 = vmul.f32 %v1218, 2.0
        %v1235 = vmul.f32 %v1219, 2.0
        %v1236 = vmul.f32 %v1220, 2.0
        %v1237 = vmul.f32 %v1221, 2.0
        %v1238 = vmul.f32 %v1222, 2.0
        %v1239 = vmul.f32 %v1223, 2.0
        %v1240 = vmul.f32 %v1224, 2.0
        %v1241 = vmul.f32 %v1225, 2.0
        %v1242 = vmul.f32 %v1226, 2.0
        %v1243 = vmul.f32 %v1227, %v1211
        %v1244 = vmul.f32 %v1228, %v1212
        %v1245 = vmul.f32 %v1229, %v1213
        %v1246 = vmul.f32 %v1230, %v1214
        %v1247 = vmul.f32 %v1231, %v1215
        %v1248 = vmul.f32 %v1232, %v1216
        %v1249 = vmul.f32 %v1233, %v1217
        %v1250 = vmul.f32 %v1234, %v1218
        %v1251 = vmul.f32 %v1235, %v1219
        %v1252 = vmul.f32 %v1236, %v1220
        %v1253 = vmul.f32 %v1237, %v1221
        %v1254 = vmul.f32 %v1238, %v1222
        %v1255 = vmul.f32 %v1239, %v1223
        %v1256 = vmul.f32 %v1240, %v1224
        %v1257 = vmul.f32 %v1241, %v1225
        %v1258 = vmul.f32 %v1242, %v1226
        %v1259 = vsub.f32 %v1243, %v1211
        %v1260 = vsub.f32 %v1244, %v1212
        %v1261 = vsub.f32 %v1245, %v1213
        %v1262 = vsub.f32 %v1246, %v1214
        %v1263 = vsub.f32 %v1247, %v1215
        %v1264 = vsub.f32 %v1248, %v1216
        %v1265 = vsub.f32 %v1249, %v1217
        %v1266 = vsub.f32 %v1250, %v1218
        %v1267 = vsub.f32 %v1251, %v1219
        %v1268 = vsub.f32 %v1252, %v1220
        %v1269 = vsub.f32 %v1253, %v1221
        %v1270 = vsub.f32 %v1254, %v1222
        %v1271 = vsub.f32 %v1255, %v1223
        %v1272 = vsub.f32 %v1256, %v1224
        %v1273 = vsub.f32 %v1257, %v1225
        %v1274 = vsub.f32 %v1258, %v1226
        %v1275 = vstv %s388
        %v1276 = vmul.f32 %v1275, %v1259
        %v1277 = vmul.f32 %v1275, %v1260
        %v1278 = vmul.f32 %v1275, %v1261
        %v1279 = vmul.f32 %v1275, %v1262
        %v1280 = vmul.f32 %v1275, %v1263
        %v1281 = vmul.f32 %v1275, %v1264
        %v1282 = vmul.f32 %v1275, %v1265
        %v1283 = vmul.f32 %v1275, %v1266
        %v1284 = vmul.f32 %v1275, %v1267
        %v1285 = vmul.f32 %v1275, %v1268
        %v1286 = vmul.f32 %v1275, %v1269
        %v1287 = vmul.f32 %v1275, %v1270
        %v1288 = vmul.f32 %v1275, %v1271
        %v1289 = vmul.f32 %v1275, %v1272
        %v1290 = vmul.f32 %v1275, %v1273
        %v1291 = vmul.f32 %v1275, %v1274
        %v1292 = vmul.f32 %v1276, %v1162
        %v1293 = vmul.f32 %v1277, %v1163
        %v1294 = vmul.f32 %v1278, %v1164
        %v1295 = vmul.f32 %v1279, %v1165
        %v1296 = vmul.f32 %v1280, %v1166
        %v1297 = vmul.f32 %v1281, %v1167
        %v1298 = vmul.f32 %v1282, %v1168
        %v1299 = vmul.f32 %v1283, %v1169
        %v1300 = vmul.f32 %v1284, %v1170
        %v1301 = vmul.f32 %v1285, %v1171
        %v1302 = vmul.f32 %v1286, %v1172
        %v1303 = vmul.f32 %v1287, %v1173
        %v1304 = vmul.f32 %v1288, %v1174
        %v1305 = vmul.f32 %v1289, %v1175
        %v1306 = vmul.f32 %v1290, %v1176
        %v1307 = vmul.f32 %v1291, %v1177
        %v1308 = vsel %vm1098, %v1292, 0.0
        %v1309 = vsel %vm1099, %v1293, 0.0
        %v1310 = vsel %vm1100, %v1294, 0.0
        %v1311 = vsel %vm1101, %v1295, 0.0
        %v1312 = vsel %vm1102, %v1296, 0.0
        %v1313 = vsel %vm1103, %v1297, 0.0
        %v1314 = vsel %vm1104, %v1298, 0.0
        %v1315 = vsel %vm1105, %v1299, 0.0
        %v1316 = vsel %vm1106, %v1300, 0.0
        %v1317 = vsel %vm1107, %v1301, 0.0
        %v1318 = vsel %vm1108, %v1302, 0.0
        %v1319 = vsel %vm1109, %v1303, 0.0
        %v1320 = vsel %vm1110, %v1304, 0.0
        %v1321 = vsel %vm1111, %v1305, 0.0
        %v1322 = vsel %vm1112, %v1306, 0.0
        %v1323 = vsel %vm1113, %v1307, 0.0
        %v1324 = vmul.f32 %v579, %v1308
        %v1325 = vmul.f32 %v580, %v1309
        %v1326 = vmul.f32 %v581, %v1310
        %v1327 = vmul.f32 %v582, %v1311
        %v1328 = vmul.f32 %v583, %v1312
        %v1329 = vmul.f32 %v584, %v1313
        %v1330 = vmul.f32 %v585, %v1314
        %v1331 = vmul.f32 %v586, %v1315
        %v1332 = vmul.f32 %v587, %v1316
        %v1333 = vmul.f32 %v588, %v1317
        %v1334 = vmul.f32 %v589, %v1318
        %v1335 = vmul.f32 %v590, %v1319
        %v1336 = vmul.f32 %v591, %v1320
        %v1337 = vmul.f32 %v592, %v1321
        %v1338 = vmul.f32 %v593, %v1322
        %v1339 = vmul.f32 %v594, %v1323
        %v1340 = vmul.f32 %v746, %v1308
        %v1341 = vmul.f32 %v747, %v1309
        %v1342 = vmul.f32 %v748, %v1310
        %v1343 = vmul.f32 %v749, %v1311
        %v1344 = vmul.f32 %v750, %v1312
        %v1345 = vmul.f32 %v751, %v1313
        %v1346 = vmul.f32 %v752, %v1314
        %v1347 = vmul.f32 %v753, %v1315
        %v1348 = vmul.f32 %v754, %v1316
        %v1349 = vmul.f32 %v755, %v1317
        %v1350 = vmul.f32 %v756, %v1318
        %v1351 = vmul.f32 %v757, %v1319
        %v1352 = vmul.f32 %v758, %v1320
        %v1353 = vmul.f32 %v759, %v1321
        %v1354 = vmul.f32 %v760, %v1322
        %v1355 = vmul.f32 %v761, %v1323
        %v1356 = vmul.f32 %v1324, %v746
        %v1357 = vmul.f32 %v1325, %v747
        %v1358 = vmul.f32 %v1326, %v748
        %v1359 = vmul.f32 %v1327, %v749
        %v1360 = vmul.f32 %v1328, %v750
        %v1361 = vmul.f32 %v1329, %v751
        %v1362 = vmul.f32 %v1330, %v752
        %v1363 = vmul.f32 %v1331, %v753
        %v1364 = vmul.f32 %v1332, %v754
        %v1365 = vmul.f32 %v1333, %v755
        %v1366 = vmul.f32 %v1334, %v756
        %v1367 = vmul.f32 %v1335, %v757
        %v1368 = vmul.f32 %v1336, %v758
        %v1369 = vmul.f32 %v1337, %v759
        %v1370 = vmul.f32 %v1338, %v760
        %v1371 = vmul.f32 %v1339, %v761
        %v1372 = vadd.f32 %v1356, %v1357
        %v1373 = vadd.f32 %v1372, %v1358
        %v1374 = vadd.f32 %v1373, %v1359
        %v1375 = vadd.f32 %v1374, %v1360
        %v1376 = vadd.f32 %v1375, %v1361
        %v1377 = vadd.f32 %v1376, %v1362
        %v1378 = vadd.f32 %v1377, %v1363
        %v1379 = vadd.f32 %v1378, %v1364
        %v1380 = vadd.f32 %v1379, %v1365
        %v1381 = vadd.f32 %v1380, %v1366
        %v1382 = vadd.f32 %v1381, %v1367
        %v1383 = vadd.f32 %v1382, %v1368
        %v1384 = vadd.f32 %v1383, %v1369
        %v1385 = vadd.f32 %v1384, %v1370
        %v1386 = vadd.f32 %v1385, %v1371
        %v1387 = vrot.slane %v1386, 4
        %v1388 = vadd.f32 %v1386, %v1387
        %v1389 = vrot.slane %v1388, 2
        %v1390 = vadd.f32 %v1388, %v1389
        %v1391 = vrot.slane %v1390, 1
        %v1392 = vadd.f32 %v1390, %v1391
        %v1393 = vmul.f32 %v1324, %v913
        %v1394 = vmul.f32 %v1325, %v914
        %v1395 = vmul.f32 %v1326, %v915
        %v1396 = vmul.f32 %v1327, %v916
        %v1397 = vmul.f32 %v1328, %v917
        %v1398 = vmul.f32 %v1329, %v918
        %v1399 = vmul.f32 %v1330, %v919
        %v1400 = vmul.f32 %v1331, %v920
        %v1401 = vmul.f32 %v1332, %v921
        %v1402 = vmul.f32 %v1333, %v922
        %v1403 = vmul.f32 %v1334, %v923
        %v1404 = vmul.f32 %v1335, %v924
        %v1405 = vmul.f32 %v1336, %v925
        %v1406 = vmul.f32 %v1337, %v926
        %v1407 = vmul.f32 %v1338, %v927
        %v1408 = vmul.f32 %v1339, %v928
        %v1409 = vadd.f32 %v1393, %v1394
        %v1410 = vadd.f32 %v1409, %v1395
        %v1411 = vadd.f32 %v1410, %v1396
        %v1412 = vadd.f32 %v1411, %v1397
        %v1413 = vadd.f32 %v1412, %v1398
        %v1414 = vadd.f32 %v1413, %v1399
        %v1415 = vadd.f32 %v1414, %v1400
        %v1416 = vadd.f32 %v1415, %v1401
        %v1417 = vadd.f32 %v1416, %v1402
        %v1418 = vadd.f32 %v1417, %v1403
        %v1419 = vadd.f32 %v1418, %v1404
        %v1420 = vadd.f32 %v1419, %v1405
        %v1421 = vadd.f32 %v1420, %v1406
        %v1422 = vadd.f32 %v1421, %v1407
        %v1423 = vadd.f32 %v1422, %v1408
        %v1424 = vrot.slane %v1423, 4
        %v1425 = vadd.f32 %v1423, %v1424
        %v1426 = vrot.slane %v1425, 2
        %v1427 = vadd.f32 %v1425, %v1426
        %v1428 = vrot.slane %v1427, 1
        %v1429 = vadd.f32 %v1427, %v1428
        %v1430 = vmul.f32 %v1340, %v913
        %v1431 = vmul.f32 %v1341, %v914
        %v1432 = vmul.f32 %v1342, %v915
        %v1433 = vmul.f32 %v1343, %v916
        %v1434 = vmul.f32 %v1344, %v917
        %v1435 = vmul.f32 %v1345, %v918
        %v1436 = vmul.f32 %v1346, %v919
        %v1437 = vmul.f32 %v1347, %v920
        %v1438 = vmul.f32 %v1348, %v921
        %v1439 = vmul.f32 %v1349, %v922
        %v1440 = vmul.f32 %v1350, %v923
        %v1441 = vmul.f32 %v1351, %v924
        %v1442 = vmul.f32 %v1352, %v925
        %v1443 = vmul.f32 %v1353, %v926
        %v1444 = vmul.f32 %v1354, %v927
        %v1445 = vmul.f32 %v1355, %v928
        %v1446 = vadd.f32 %v1430, %v1431
        %v1447 = vadd.f32 %v1446, %v1432
        %v1448 = vadd.f32 %v1447, %v1433
        %v1449 = vadd.f32 %v1448, %v1434
        %v1450 = vadd.f32 %v1449, %v1435
        %v1451 = vadd.f32 %v1450, %v1436
        %v1452 = vadd.f32 %v1451, %v1437
        %v1453 = vadd.f32 %v1452, %v1438
        %v1454 = vadd.f32 %v1453, %v1439
        %v1455 = vadd.f32 %v1454, %v1440
        %v1456 = vadd.f32 %v1455, %v1441
        %v1457 = vadd.f32 %v1456, %v1442
        %v1458 = vadd.f32 %v1457, %v1443
        %v1459 = vadd.f32 %v1458, %v1444
        %v1460 = vadd.f32 %v1459, %v1445
        %v1461 = vrot.slane %v1460, 4
        %v1462 = vadd.f32 %v1460, %v1461
        %v1463 = vrot.slane %v1462, 2
        %v1464 = vadd.f32 %v1462, %v1463
        %v1465 = vrot.slane %v1464, 1
        %v1466 = vadd.f32 %v1464, %v1465
        %s1467 = sadd.s32 %s26, 1
        // While loop
        $region49: #{tpu_custom_call.1} parent=43 // loop_pre_header
          _
        $region50: #{tpu_custom_call.1} parent=43 // loop_header
          %s1469 = sphi %s1467, %s1471
          %p1470 = scmp.ge.s32.totalorder %s1469, 1
          %v1474 = vphi %v1392, %v2269
          %v1475 = vphi %v1429, %v2270
          %v1476 = vphi %v1466, %v2271
        $region51: #{tpu_custom_call.1} parent=43 // loop_header_branch
          %1473 = sbr.rel (%p1470) target = $region55
        $region52: #{tpu_custom_call.1} parent=43 // loop_body
          %s1477 = smul.u32 %s1469, 128
          %s1478 = sshra.s32 %s1477, 7
          %s1479 = sand.u32 %s1477, 127
          %s1480 = scalar_lea.vmem %s316, %s1478
          %v1481 = vld [vmem:[%s1480] sm:$0x7]
          %s1482 = scalar_lea.vmem %s5, %s1478
          %v1483 = vld [vmem:[%s1482] sm:$0x1]
          %v1484 = vlaneseq
          %v1485 = vshrl.u32 %v1484, 7
          %v1486 = vsub.s32 0, %v1485
          %v1487 = vrot.slane %v1481, %v1486
          %v1488 = vsub.f32 %v1487, %v419
          %v1489 = vsub.f32 %v1487, %v424
          %v1490 = vsub.f32 %v1487, %v429
          %v1491 = vsub.f32 %v1487, %v434
          %v1492 = vsub.f32 %v1487, %v439
          %v1493 = vsub.f32 %v1487, %v444
          %v1494 = vsub.f32 %v1487, %v449
          %v1495 = vsub.f32 %v1487, %v454
          %v1496 = vsub.f32 %v1487, %v459
          %v1497 = vsub.f32 %v1487, %v464
          %v1498 = vsub.f32 %v1487, %v469
          %v1499 = vsub.f32 %v1487, %v474
          %v1500 = vsub.f32 %v1487, %v479
          %v1501 = vsub.f32 %v1487, %v484
          %v1502 = vsub.f32 %v1487, %v489
          %v1503 = vsub.f32 %v1487, %v494
          %v1504 = vadd.f32 %v1488, %v512
          %v1505 = vadd.f32 %v1489, %v512
          %v1506 = vadd.f32 %v1490, %v512
          %v1507 = vadd.f32 %v1491, %v512
          %v1508 = vadd.f32 %v1492, %v512
          %v1509 = vadd.f32 %v1493, %v512
          %v1510 = vadd.f32 %v1494, %v512
          %v1511 = vadd.f32 %v1495, %v512
          %v1512 = vadd.f32 %v1496, %v512
          %v1513 = vadd.f32 %v1497, %v512
          %v1514 = vadd.f32 %v1498, %v512
          %v1515 = vadd.f32 %v1499, %v512
          %v1516 = vadd.f32 %v1500, %v512
          %v1517 = vadd.f32 %v1501, %v512
          %v1518 = vadd.f32 %v1502, %v512
          %v1519 = vadd.f32 %v1503, %v512
          %v1520 = vmul.f32 %v1504, %v529
          %v1521 = vmul.f32 %v1505, %v529
          %v1522 = vmul.f32 %v1506, %v529
          %v1523 = vmul.f32 %v1507, %v529
          %v1524 = vmul.f32 %v1508, %v529
          %v1525 = vmul.f32 %v1509, %v529
          %v1526 = vmul.f32 %v1510, %v529
          %v1527 = vmul.f32 %v1511, %v529
          %v1528 = vmul.f32 %v1512, %v529
          %v1529 = vmul.f32 %v1513, %v529
          %v1530 = vmul.f32 %v1514, %v529
          %v1531 = vmul.f32 %v1515, %v529
          %v1532 = vmul.f32 %v1516, %v529
          %v1533 = vmul.f32 %v1517, %v529
          %v1534 = vmul.f32 %v1518, %v529
          %v1535 = vmul.f32 %v1519, %v529
          %v1536 = vfloor.f32 %v1520
          %v1537 = vfloor.f32 %v1521
          %v1538 = vfloor.f32 %v1522
          %v1539 = vfloor.f32 %v1523
          %v1540 = vfloor.f32 %v1524
          %v1541 = vfloor.f32 %v1525
          %v1542 = vfloor.f32 %v1526
          %v1543 = vfloor.f32 %v1527
          %v1544 = vfloor.f32 %v1528
          %v1545 = vfloor.f32 %v1529
          %v1546 = vfloor.f32 %v1530
          %v1547 = vfloor.f32 %v1531
          %v1548 = vfloor.f32 %v1532
          %v1549 = vfloor.f32 %v1533
          %v1550 = vfloor.f32 %v1534
          %v1551 = vfloor.f32 %v1535
          %v1552 = vmul.f32 %v1536, %v562
          %v1553 = vmul.f32 %v1537, %v562
          %v1554 = vmul.f32 %v1538, %v562
          %v1555 = vmul.f32 %v1539, %v562
          %v1556 = vmul.f32 %v1540, %v562
          %v1557 = vmul.f32 %v1541, %v562
          %v1558 = vmul.f32 %v1542, %v562
          %v1559 = vmul.f32 %v1543, %v562
          %v1560 = vmul.f32 %v1544, %v562
          %v1561 = vmul.f32 %v1545, %v562
          %v1562 = vmul.f32 %v1546, %v562
          %v1563 = vmul.f32 %v1547, %v562
          %v1564 = vmul.f32 %v1548, %v562
          %v1565 = vmul.f32 %v1549, %v562
          %v1566 = vmul.f32 %v1550, %v562
          %v1567 = vmul.f32 %v1551, %v562
          %v1568 = vsub.f32 %v1488, %v1552
          %v1569 = vsub.f32 %v1489, %v1553
          %v1570 = vsub.f32 %v1490, %v1554
          %v1571 = vsub.f32 %v1491, %v1555
          %v1572 = vsub.f32 %v1492, %v1556
          %v1573 = vsub.f32 %v1493, %v1557
          %v1574 = vsub.f32 %v1494, %v1558
          %v1575 = vsub.f32 %v1495, %v1559
          %v1576 = vsub.f32 %v1496, %v1560
          %v1577 = vsub.f32 %v1497, %v1561
          %v1578 = vsub.f32 %v1498, %v1562
          %v1579 = vsub.f32 %v1499, %v1563
          %v1580 = vsub.f32 %v1500, %v1564
          %v1581 = vsub.f32 %v1501, %v1565
          %v1582 = vsub.f32 %v1502, %v1566
          %v1583 = vsub.f32 %v1503, %v1567
          %v1584 = vlaneseq
          %v1585 = vshrl.u32 %v1584, 7
          %v1586 = vsub.s32 1, %v1585
          %v1587 = vrot.slane %v1481, %v1586
          %v1588 = vsub.f32 %v1587, %v601
          %v1589 = vsub.f32 %v1587, %v605
          %v1590 = vsub.f32 %v1587, %v609
          %v1591 = vsub.f32 %v1587, %v613
          %v1592 = vsub.f32 %v1587, %v617
          %v1593 = vsub.f32 %v1587, %v621
          %v1594 = vsub.f32 %v1587, %v625
          %v1595 = vsub.f32 %v1587, %v629
          %v1596 = vsub.f32 %v1587, %v633
          %v1597 = vsub.f32 %v1587, %v637
          %v1598 = vsub.f32 %v1587, %v641
          %v1599 = vsub.f32 %v1587, %v645
          %v1600 = vsub.f32 %v1587, %v649
          %v1601 = vsub.f32 %v1587, %v653
          %v1602 = vsub.f32 %v1587, %v657
          %v1603 = vsub.f32 %v1587, %v661
          %v1604 = vadd.f32 %v1588, %v679
          %v1605 = vadd.f32 %v1589, %v679
          %v1606 = vadd.f32 %v1590, %v679
          %v1607 = vadd.f32 %v1591, %v679
          %v1608 = vadd.f32 %v1592, %v679
          %v1609 = vadd.f32 %v1593, %v679
          %v1610 = vadd.f32 %v1594, %v679
          %v1611 = vadd.f32 %v1595, %v679
          %v1612 = vadd.f32 %v1596, %v679
          %v1613 = vadd.f32 %v1597, %v679
          %v1614 = vadd.f32 %v1598, %v679
          %v1615 = vadd.f32 %v1599, %v679
          %v1616 = vadd.f32 %v1600, %v679
          %v1617 = vadd.f32 %v1601, %v679
          %v1618 = vadd.f32 %v1602, %v679
          %v1619 = vadd.f32 %v1603, %v679
          %v1620 = vmul.f32 %v1604, %v696
          %v1621 = vmul.f32 %v1605, %v696
          %v1622 = vmul.f32 %v1606, %v696
          %v1623 = vmul.f32 %v1607, %v696
          %v1624 = vmul.f32 %v1608, %v696
          %v1625 = vmul.f32 %v1609, %v696
          %v1626 = vmul.f32 %v1610, %v696
          %v1627 = vmul.f32 %v1611, %v696
          %v1628 = vmul.f32 %v1612, %v696
          %v1629 = vmul.f32 %v1613, %v696
          %v1630 = vmul.f32 %v1614, %v696
          %v1631 = vmul.f32 %v1615, %v696
          %v1632 = vmul.f32 %v1616, %v696
          %v1633 = vmul.f32 %v1617, %v696
          %v1634 = vmul.f32 %v1618, %v696
          %v1635 = vmul.f32 %v1619, %v696
          %v1636 = vfloor.f32 %v1620
          %v1637 = vfloor.f32 %v1621
          %v1638 = vfloor.f32 %v1622
          %v1639 = vfloor.f32 %v1623
          %v1640 = vfloor.f32 %v1624
          %v1641 = vfloor.f32 %v1625
          %v1642 = vfloor.f32 %v1626
          %v1643 = vfloor.f32 %v1627
          %v1644 = vfloor.f32 %v1628
          %v1645 = vfloor.f32 %v1629
          %v1646 = vfloor.f32 %v1630
          %v1647 = vfloor.f32 %v1631
          %v1648 = vfloor.f32 %v1632
          %v1649 = vfloor.f32 %v1633
          %v1650 = vfloor.f32 %v1634
          %v1651 = vfloor.f32 %v1635
          %v1652 = vmul.f32 %v1636, %v729
          %v1653 = vmul.f32 %v1637, %v729
          %v1654 = vmul.f32 %v1638, %v729
          %v1655 = vmul.f32 %v1639, %v729
          %v1656 = vmul.f32 %v1640, %v729
          %v1657 = vmul.f32 %v1641, %v729
          %v1658 = vmul.f32 %v1642, %v729
          %v1659 = vmul.f32 %v1643, %v729
          %v1660 = vmul.f32 %v1644, %v729
          %v1661 = vmul.f32 %v1645, %v729
          %v1662 = vmul.f32 %v1646, %v729
          %v1663 = vmul.f32 %v1647, %v729
          %v1664 = vmul.f32 %v1648, %v729
          %v1665 = vmul.f32 %v1649, %v729
          %v1666 = vmul.f32 %v1650, %v729
          %v1667 = vmul.f32 %v1651, %v729
          %v1668 = vsub.f32 %v1588, %v1652
          %v1669 = vsub.f32 %v1589, %v1653
          %v1670 = vsub.f32 %v1590, %v1654
          %v1671 = vsub.f32 %v1591, %v1655
          %v1672 = vsub.f32 %v1592, %v1656
          %v1673 = vsub.f32 %v1593, %v1657
          %v1674 = vsub.f32 %v1594, %v1658
          %v1675 = vsub.f32 %v1595, %v1659
          %v1676 = vsub.f32 %v1596, %v1660
          %v1677 = vsub.f32 %v1597, %v1661
          %v1678 = vsub.f32 %v1598, %v1662
          %v1679 = vsub.f32 %v1599, %v1663
          %v1680 = vsub.f32 %v1600, %v1664
          %v1681 = vsub.f32 %v1601, %v1665
          %v1682 = vsub.f32 %v1602, %v1666
          %v1683 = vsub.f32 %v1603, %v1667
          %v1684 = vlaneseq
          %v1685 = vshrl.u32 %v1684, 7
          %v1686 = vsub.s32 2, %v1685
          %v1687 = vrot.slane %v1481, %v1686
          %v1688 = vsub.f32 %v1687, %v768
          %v1689 = vsub.f32 %v1687, %v772
          %v1690 = vsub.f32 %v1687, %v776
          %v1691 = vsub.f32 %v1687, %v780
          %v1692 = vsub.f32 %v1687, %v784
          %v1693 = vsub.f32 %v1687, %v788
          %v1694 = vsub.f32 %v1687, %v792
          %v1695 = vsub.f32 %v1687, %v796
          %v1696 = vsub.f32 %v1687, %v800
          %v1697 = vsub.f32 %v1687, %v804
          %v1698 = vsub.f32 %v1687, %v808
          %v1699 = vsub.f32 %v1687, %v812
          %v1700 = vsub.f32 %v1687, %v816
          %v1701 = vsub.f32 %v1687, %v820
          %v1702 = vsub.f32 %v1687, %v824
          %v1703 = vsub.f32 %v1687, %v828
          %v1704 = vadd.f32 %v1688, %v846
          %v1705 = vadd.f32 %v1689, %v846
          %v1706 = vadd.f32 %v1690, %v846
          %v1707 = vadd.f32 %v1691, %v846
          %v1708 = vadd.f32 %v1692, %v846
          %v1709 = vadd.f32 %v1693, %v846
          %v1710 = vadd.f32 %v1694, %v846
          %v1711 = vadd.f32 %v1695, %v846
          %v1712 = vadd.f32 %v1696, %v846
          %v1713 = vadd.f32 %v1697, %v846
          %v1714 = vadd.f32 %v1698, %v846
          %v1715 = vadd.f32 %v1699, %v846
          %v1716 = vadd.f32 %v1700, %v846
          %v1717 = vadd.f32 %v1701, %v846
          %v1718 = vadd.f32 %v1702, %v846
          %v1719 = vadd.f32 %v1703, %v846
          %v1720 = vmul.f32 %v1704, %v863
          %v1721 = vmul.f32 %v1705, %v863
          %v1722 = vmul.f32 %v1706, %v863
          %v1723 = vmul.f32 %v1707, %v863
          %v1724 = vmul.f32 %v1708, %v863
          %v1725 = vmul.f32 %v1709, %v863
          %v1726 = vmul.f32 %v1710, %v863
          %v1727 = vmul.f32 %v1711, %v863
          %v1728 = vmul.f32 %v1712, %v863
          %v1729 = vmul.f32 %v1713, %v863
          %v1730 = vmul.f32 %v1714, %v863
          %v1731 = vmul.f32 %v1715, %v863
          %v1732 = vmul.f32 %v1716, %v863
          %v1733 = vmul.f32 %v1717, %v863
          %v1734 = vmul.f32 %v1718, %v863
          %v1735 = vmul.f32 %v1719, %v863
          %v1736 = vfloor.f32 %v1720
          %v1737 = vfloor.f32 %v1721
          %v1738 = vfloor.f32 %v1722
          %v1739 = vfloor.f32 %v1723
          %v1740 = vfloor.f32 %v1724
          %v1741 = vfloor.f32 %v1725
          %v1742 = vfloor.f32 %v1726
          %v1743 = vfloor.f32 %v1727
          %v1744 = vfloor.f32 %v1728
          %v1745 = vfloor.f32 %v1729
          %v1746 = vfloor.f32 %v1730
          %v1747 = vfloor.f32 %v1731
          %v1748 = vfloor.f32 %v1732
          %v1749 = vfloor.f32 %v1733
          %v1750 = vfloor.f32 %v1734
          %v1751 = vfloor.f32 %v1735
          %v1752 = vmul.f32 %v1736, %v896
          %v1753 = vmul.f32 %v1737, %v896
          %v1754 = vmul.f32 %v1738, %v896
          %v1755 = vmul.f32 %v1739, %v896
          %v1756 = vmul.f32 %v1740, %v896
          %v1757 = vmul.f32 %v1741, %v896
          %v1758 = vmul.f32 %v1742, %v896
          %v1759 = vmul.f32 %v1743, %v896
          %v1760 = vmul.f32 %v1744, %v896
          %v1761 = vmul.f32 %v1745, %v896
          %v1762 = vmul.f32 %v1746, %v896
          %v1763 = vmul.f32 %v1747, %v896
          %v1764 = vmul.f32 %v1748, %v896
          %v1765 = vmul.f32 %v1749, %v896
          %v1766 = vmul.f32 %v1750, %v896
          %v1767 = vmul.f32 %v1751, %v896
          %v1768 = vsub.f32 %v1688, %v1752
          %v1769 = vsub.f32 %v1689, %v1753
          %v1770 = vsub.f32 %v1690, %v1754
          %v1771 = vsub.f32 %v1691, %v1755
          %v1772 = vsub.f32 %v1692, %v1756
          %v1773 = vsub.f32 %v1693, %v1757
          %v1774 = vsub.f32 %v1694, %v1758
          %v1775 = vsub.f32 %v1695, %v1759
          %v1776 = vsub.f32 %v1696, %v1760
          %v1777 = vsub.f32 %v1697, %v1761
          %v1778 = vsub.f32 %v1698, %v1762
          %v1779 = vsub.f32 %v1699, %v1763
          %v1780 = vsub.f32 %v1700, %v1764
          %v1781 = vsub.f32 %v1701, %v1765
          %v1782 = vsub.f32 %v1702, %v1766
          %v1783 = vsub.f32 %v1703, %v1767
          %v1784 = vmul.f32 %v1568, %v1568
          %v1785 = vmul.f32 %v1569, %v1569
          %v1786 = vmul.f32 %v1570, %v1570
          %v1787 = vmul.f32 %v1571, %v1571
          %v1788 = vmul.f32 %v1572, %v1572
          %v1789 = vmul.f32 %v1573, %v1573
          %v1790 = vmul.f32 %v1574, %v1574
          %v1791 = vmul.f32 %v1575, %v1575
          %v1792 = vmul.f32 %v1576, %v1576
          %v1793 = vmul.f32 %v1577, %v1577
          %v1794 = vmul.f32 %v1578, %v1578
          %v1795 = vmul.f32 %v1579, %v1579
          %v1796 = vmul.f32 %v1580, %v1580
          %v1797 = vmul.f32 %v1581, %v1581
          %v1798 = vmul.f32 %v1582, %v1582
          %v1799 = vmul.f32 %v1583, %v1583
          %v1800 = vmul.f32 %v1668, %v1668
          %v1801 = vmul.f32 %v1669, %v1669
          %v1802 = vmul.f32 %v1670, %v1670
          %v1803 = vmul.f32 %v1671, %v1671
          %v1804 = vmul.f32 %v1672, %v1672
          %v1805 = vmul.f32 %v1673, %v1673
          %v1806 = vmul.f32 %v1674, %v1674
          %v1807 = vmul.f32 %v1675, %v1675
          %v1808 = vmul.f32 %v1676, %v1676
          %v1809 = vmul.f32 %v1677, %v1677
          %v1810 = vmul.f32 %v1678, %v1678
          %v1811 = vmul.f32 %v1679, %v1679
          %v1812 = vmul.f32 %v1680, %v1680
          %v1813 = vmul.f32 %v1681, %v1681
          %v1814 = vmul.f32 %v1682, %v1682
          %v1815 = vmul.f32 %v1683, %v1683
          %v1816 = vadd.f32 %v1784, %v1800
          %v1817 = vadd.f32 %v1785, %v1801
          %v1818 = vadd.f32 %v1786, %v1802
          %v1819 = vadd.f32 %v1787, %v1803
          %v1820 = vadd.f32 %v1788, %v1804
          %v1821 = vadd.f32 %v1789, %v1805
          %v1822 = vadd.f32 %v1790, %v1806
          %v1823 = vadd.f32 %v1791, %v1807
          %v1824 = vadd.f32 %v1792, %v1808
          %v1825 = vadd.f32 %v1793, %v1809
          %v1826 = vadd.f32 %v1794, %v1810
          %v1827 = vadd.f32 %v1795, %v1811
          %v1828 = vadd.f32 %v1796, %v1812
          %v1829 = vadd.f32 %v1797, %v1813
          %v1830 = vadd.f32 %v1798, %v1814
          %v1831 = vadd.f32 %v1799, %v1815
          %v1832 = vmul.f32 %v1768, %v1768
          %v1833 = vmul.f32 %v1769, %v1769
          %v1834 = vmul.f32 %v1770, %v1770
          %v1835 = vmul.f32 %v1771, %v1771
          %v1836 = vmul.f32 %v1772, %v1772
          %v1837 = vmul.f32 %v1773, %v1773
          %v1838 = vmul.f32 %v1774, %v1774
          %v1839 = vmul.f32 %v1775, %v1775
          %v1840 = vmul.f32 %v1776, %v1776
          %v1841 = vmul.f32 %v1777, %v1777
          %v1842 = vmul.f32 %v1778, %v1778
          %v1843 = vmul.f32 %v1779, %v1779
          %v1844 = vmul.f32 %v1780, %v1780
          %v1845 = vmul.f32 %v1781, %v1781
          %v1846 = vmul.f32 %v1782, %v1782
          %v1847 = vmul.f32 %v1783, %v1783
          %v1848 = vadd.f32 %v1816, %v1832
          %v1849 = vadd.f32 %v1817, %v1833
          %v1850 = vadd.f32 %v1818, %v1834
          %v1851 = vadd.f32 %v1819, %v1835
          %v1852 = vadd.f32 %v1820, %v1836
          %v1853 = vadd.f32 %v1821, %v1837
          %v1854 = vadd.f32 %v1822, %v1838
          %v1855 = vadd.f32 %v1823, %v1839
          %v1856 = vadd.f32 %v1824, %v1840
          %v1857 = vadd.f32 %v1825, %v1841
          %v1858 = vadd.f32 %v1826, %v1842
          %v1859 = vadd.f32 %v1827, %v1843
          %v1860 = vadd.f32 %v1828, %v1844
          %v1861 = vadd.f32 %v1829, %v1845
          %v1862 = vadd.f32 %v1830, %v1846
          %v1863 = vadd.f32 %v1831, %v1847
          %v1865 = vlaneseq
          %v1866 = vshrl.u32 %v1865, 7
          %v1867 = vsub.s32 0, %v1866
          %v1868 = vrot.slane %v1483, %v1867
          %vm1870 = vcmp.lt.f32.partialorder %v1848, %v1868
          %vm1871 = vcmp.lt.f32.partialorder %v1849, %v1868
          %vm1872 = vcmp.lt.f32.partialorder %v1850, %v1868
          %vm1873 = vcmp.lt.f32.partialorder %v1851, %v1868
          %vm1874 = vcmp.lt.f32.partialorder %v1852, %v1868
          %vm1875 = vcmp.lt.f32.partialorder %v1853, %v1868
          %vm1876 = vcmp.lt.f32.partialorder %v1854, %v1868
          %vm1877 = vcmp.lt.f32.partialorder %v1855, %v1868
          %vm1878 = vcmp.lt.f32.partialorder %v1856, %v1868
          %vm1879 = vcmp.lt.f32.partialorder %v1857, %v1868
          %vm1880 = vcmp.lt.f32.partialorder %v1858, %v1868
          %vm1881 = vcmp.lt.f32.partialorder %v1859, %v1868
          %vm1882 = vcmp.lt.f32.partialorder %v1860, %v1868
          %vm1883 = vcmp.lt.f32.partialorder %v1861, %v1868
          %vm1884 = vcmp.lt.f32.partialorder %v1862, %v1868
          %vm1885 = vcmp.lt.f32.partialorder %v1863, %v1868
          %vm1886 = vcmp.ne.f32.partialorder %v1848, 0.0
          %vm1887 = vcmp.ne.f32.partialorder %v1849, 0.0
          %vm1888 = vcmp.ne.f32.partialorder %v1850, 0.0
          %vm1889 = vcmp.ne.f32.partialorder %v1851, 0.0
          %vm1890 = vcmp.ne.f32.partialorder %v1852, 0.0
          %vm1891 = vcmp.ne.f32.partialorder %v1853, 0.0
          %vm1892 = vcmp.ne.f32.partialorder %v1854, 0.0
          %vm1893 = vcmp.ne.f32.partialorder %v1855, 0.0
          %vm1894 = vcmp.ne.f32.partialorder %v1856, 0.0
          %vm1895 = vcmp.ne.f32.partialorder %v1857, 0.0
          %vm1896 = vcmp.ne.f32.partialorder %v1858, 0.0
          %vm1897 = vcmp.ne.f32.partialorder %v1859, 0.0
          %vm1898 = vcmp.ne.f32.partialorder %v1860, 0.0
          %vm1899 = vcmp.ne.f32.partialorder %v1861, 0.0
          %vm1900 = vcmp.ne.f32.partialorder %v1862, 0.0
          %vm1901 = vcmp.ne.f32.partialorder %v1863, 0.0
          %vm1902 = vmand %vm1870, %vm1886
          %vm1903 = vmand %vm1871, %vm1887
          %vm1904 = vmand %vm1872, %vm1888
          %vm1905 = vmand %vm1873, %vm1889
          %vm1906 = vmand %vm1874, %vm1890
          %vm1907 = vmand %vm1875, %vm1891
          %vm1908 = vmand %vm1876, %vm1892
          %vm1909 = vmand %vm1877, %vm1893
          %vm1910 = vmand %vm1878, %vm1894
          %vm1911 = vmand %vm1879, %vm1895
          %vm1912 = vmand %vm1880, %vm1896
          %vm1913 = vmand %vm1881, %vm1897
          %vm1914 = vmand %vm1882, %vm1898
          %vm1915 = vmand %vm1883, %vm1899
          %vm1916 = vmand %vm1884, %vm1900
          %vm1917 = vmand %vm1885, %vm1901
          %v1918 = vrcp.pop %v1848
          %v1919 = vrcp.pop %v1849
          %v1920 = vrcp.pop %v1850
          %v1921 = vrcp.pop %v1851
          %v1922 = vrcp.pop %v1852
          %v1923 = vrcp.pop %v1853
          %v1924 = vrcp.pop %v1854
          %v1925 = vrcp.pop %v1855
          %v1926 = vrcp.pop %v1856
          %v1927 = vrcp.pop %v1857
          %v1928 = vrcp.pop %v1858
          %v1929 = vrcp.pop %v1859
          %v1930 = vrcp.pop %v1860
          %v1931 = vrcp.pop %v1861
          %v1932 = vrcp.pop %v1862
          %v1933 = vrcp.pop %v1863
          %v1934 = vmul.f32 %v1848, %v1918
          %v1935 = vmul.f32 %v1849, %v1919
          %v1936 = vmul.f32 %v1850, %v1920
          %v1937 = vmul.f32 %v1851, %v1921
          %v1938 = vmul.f32 %v1852, %v1922
          %v1939 = vmul.f32 %v1853, %v1923
          %v1940 = vmul.f32 %v1854, %v1924
          %v1941 = vmul.f32 %v1855, %v1925
          %v1942 = vmul.f32 %v1856, %v1926
          %v1943 = vmul.f32 %v1857, %v1927
          %v1944 = vmul.f32 %v1858, %v1928
          %v1945 = vmul.f32 %v1859, %v1929
          %v1946 = vmul.f32 %v1860, %v1930
          %v1947 = vmul.f32 %v1861, %v1931
          %v1948 = vmul.f32 %v1862, %v1932
          %v1949 = vmul.f32 %v1863, %v1933
          %v1950 = vsub.f32 2.0, %v1934
          %v1951 = vsub.f32 2.0, %v1935
          %v1952 = vsub.f32 2.0, %v1936
          %v1953 = vsub.f32 2.0, %v1937
          %v1954 = vsub.f32 2.0, %v1938
          %v1955 = vsub.f32 2.0, %v1939
          %v1956 = vsub.f32 2.0, %v1940
          %v1957 = vsub.f32 2.0, %v1941
          %v1958 = vsub.f32 2.0, %v1942
          %v1959 = vsub.f32 2.0, %v1943
          %v1960 = vsub.f32 2.0, %v1944
          %v1961 = vsub.f32 2.0, %v1945
          %v1962 = vsub.f32 2.0, %v1946
          %v1963 = vsub.f32 2.0, %v1947
          %v1964 = vsub.f32 2.0, %v1948
          %v1965 = vsub.f32 2.0, %v1949
          %v1966 = vmul.f32 %v1918, %v1950
          %v1967 = vmul.f32 %v1919, %v1951
          %v1968 = vmul.f32 %v1920, %v1952
          %v1969 = vmul.f32 %v1921, %v1953
          %v1970 = vmul.f32 %v1922, %v1954
          %v1971 = vmul.f32 %v1923, %v1955
          %v1972 = vmul.f32 %v1924, %v1956
          %v1973 = vmul.f32 %v1925, %v1957
          %v1974 = vmul.f32 %v1926, %v1958
          %v1975 = vmul.f32 %v1927, %v1959
          %v1976 = vmul.f32 %v1928, %v1960
          %v1977 = vmul.f32 %v1929, %v1961
          %v1978 = vmul.f32 %v1930, %v1962
          %v1979 = vmul.f32 %v1931, %v1963
          %v1980 = vmul.f32 %v1932, %v1964
          %v1981 = vmul.f32 %v1933, %v1965
          %v1982 = vmul.f32 %v1178, %v1966
          %v1983 = vmul.f32 %v1178, %v1967
          %v1984 = vmul.f32 %v1178, %v1968
          %v1985 = vmul.f32 %v1178, %v1969
          %v1986 = vmul.f32 %v1178, %v1970
          %v1987 = vmul.f32 %v1178, %v1971
          %v1988 = vmul.f32 %v1178, %v1972
          %v1989 = vmul.f32 %v1178, %v1973
          %v1990 = vmul.f32 %v1178, %v1974
          %v1991 = vmul.f32 %v1178, %v1975
          %v1992 = vmul.f32 %v1178, %v1976
          %v1993 = vmul.f32 %v1178, %v1977
          %v1994 = vmul.f32 %v1178, %v1978
          %v1995 = vmul.f32 %v1178, %v1979
          %v1996 = vmul.f32 %v1178, %v1980
          %v1997 = vmul.f32 %v1178, %v1981
          %v1998 = vmul.f32 %v1982, %v1982
          %v1999 = vmul.f32 %v1983, %v1983
          %v2000 = vmul.f32 %v1984, %v1984
          %v2001 = vmul.f32 %v1985, %v1985
          %v2002 = vmul.f32 %v1986, %v1986
          %v2003 = vmul.f32 %v1987, %v1987
          %v2004 = vmul.f32 %v1988, %v1988
          %v2005 = vmul.f32 %v1989, %v1989
          %v2006 = vmul.f32 %v1990, %v1990
          %v2007 = vmul.f32 %v1991, %v1991
          %v2008 = vmul.f32 %v1992, %v1992
          %v2009 = vmul.f32 %v1993, %v1993
          %v2010 = vmul.f32 %v1994, %v1994
          %v2011 = vmul.f32 %v1995, %v1995
          %v2012 = vmul.f32 %v1996, %v1996
          %v2013 = vmul.f32 %v1997, %v1997
          %v2014 = vmul.f32 %v1998, %v1982
          %v2015 = vmul.f32 %v1999, %v1983
          %v2016 = vmul.f32 %v2000, %v1984
          %v2017 = vmul.f32 %v2001, %v1985
          %v2018 = vmul.f32 %v2002, %v1986
          %v2019 = vmul.f32 %v2003, %v1987
          %v2020 = vmul.f32 %v2004, %v1988
          %v2021 = vmul.f32 %v2005, %v1989
          %v2022 = vmul.f32 %v2006, %v1990
          %v2023 = vmul.f32 %v2007, %v1991
          %v2024 = vmul.f32 %v2008, %v1992
          %v2025 = vmul.f32 %v2009, %v1993
          %v2026 = vmul.f32 %v2010, %v1994
          %v2027 = vmul.f32 %v2011, %v1995
          %v2028 = vmul.f32 %v2012, %v1996
          %v2029 = vmul.f32 %v2013, %v1997
          %v2030 = vmul.f32 %v2014, 2.0
          %v2031 = vmul.f32 %v2015, 2.0
          %v2032 = vmul.f32 %v2016, 2.0
          %v2033 = vmul.f32 %v2017, 2.0
          %v2034 = vmul.f32 %v2018, 2.0
          %v2035 = vmul.f32 %v2019, 2.0
          %v2036 = vmul.f32 %v2020, 2.0
          %v2037 = vmul.f32 %v2021, 2.0
          %v2038 = vmul.f32 %v2022, 2.0
          %v2039 = vmul.f32 %v2023, 2.0
          %v2040 = vmul.f32 %v2024, 2.0
          %v2041 = vmul.f32 %v2025, 2.0
          %v2042 = vmul.f32 %v2026, 2.0
          %v2043 = vmul.f32 %v2027, 2.0
          %v2044 = vmul.f32 %v2028, 2.0
          %v2045 = vmul.f32 %v2029, 2.0
          %v2046 = vmul.f32 %v2030, %v2014
          %v2047 = vmul.f32 %v2031, %v2015
          %v2048 = vmul.f32 %v2032, %v2016
          %v2049 = vmul.f32 %v2033, %v2017
          %v2050 = vmul.f32 %v2034, %v2018
          %v2051 = vmul.f32 %v2035, %v2019
          %v2052 = vmul.f32 %v2036, %v2020
          %v2053 = vmul.f32 %v2037, %v2021
          %v2054 = vmul.f32 %v2038, %v2022
          %v2055 = vmul.f32 %v2039, %v2023
          %v2056 = vmul.f32 %v2040, %v2024
          %v2057 = vmul.f32 %v2041, %v2025
          %v2058 = vmul.f32 %v2042, %v2026
          %v2059 = vmul.f32 %v2043, %v2027
          %v2060 = vmul.f32 %v2044, %v2028
          %v2061 = vmul.f32 %v2045, %v2029
          %v2062 = vsub.f32 %v2046, %v2014
          %v2063 = vsub.f32 %v2047, %v2015
          %v2064 = vsub.f32 %v2048, %v2016
          %v2065 = vsub.f32 %v2049, %v2017
          %v2066 = vsub.f32 %v2050, %v2018
          %v2067 = vsub.f32 %v2051, %v2019
          %v2068 = vsub.f32 %v2052, %v2020
          %v2069 = vsub.f32 %v2053, %v2021
          %v2070 = vsub.f32 %v2054, %v2022
          %v2071 = vsub.f32 %v2055, %v2023
          %v2072 = vsub.f32 %v2056, %v2024
          %v2073 = vsub.f32 %v2057, %v2025
          %v2074 = vsub.f32 %v2058, %v2026
          %v2075 = vsub.f32 %v2059, %v2027
          %v2076 = vsub.f32 %v2060, %v2028
          %v2077 = vsub.f32 %v2061, %v2029
          %v2078 = vmul.f32 %v1275, %v2062
          %v2079 = vmul.f32 %v1275, %v2063
          %v2080 = vmul.f32 %v1275, %v2064
          %v2081 = vmul.f32 %v1275, %v2065
          %v2082 = vmul.f32 %v1275, %v2066
          %v2083 = vmul.f32 %v1275, %v2067
          %v2084 = vmul.f32 %v1275, %v2068
          %v2085 = vmul.f32 %v1275, %v2069
          %v2086 = vmul.f32 %v1275, %v2070
          %v2087 = vmul.f32 %v1275, %v2071
          %v2088 = vmul.f32 %v1275, %v2072
          %v2089 = vmul.f32 %v1275, %v2073
          %v2090 = vmul.f32 %v1275, %v2074
          %v2091 = vmul.f32 %v1275, %v2075
          %v2092 = vmul.f32 %v1275, %v2076
          %v2093 = vmul.f32 %v1275, %v2077
          %v2094 = vmul.f32 %v2078, %v1966
          %v2095 = vmul.f32 %v2079, %v1967
          %v2096 = vmul.f32 %v2080, %v1968
          %v2097 = vmul.f32 %v2081, %v1969
          %v2098 = vmul.f32 %v2082, %v1970
          %v2099 = vmul.f32 %v2083, %v1971
          %v2100 = vmul.f32 %v2084, %v1972
          %v2101 = vmul.f32 %v2085, %v1973
          %v2102 = vmul.f32 %v2086, %v1974
          %v2103 = vmul.f32 %v2087, %v1975
          %v2104 = vmul.f32 %v2088, %v1976
          %v2105 = vmul.f32 %v2089, %v1977
          %v2106 = vmul.f32 %v2090, %v1978
          %v2107 = vmul.f32 %v2091, %v1979
          %v2108 = vmul.f32 %v2092, %v1980
          %v2109 = vmul.f32 %v2093, %v1981
          %v2110 = vsel %vm1902, %v2094, 0.0
          %v2111 = vsel %vm1903, %v2095, 0.0
          %v2112 = vsel %vm1904, %v2096, 0.0
          %v2113 = vsel %vm1905, %v2097, 0.0
          %v2114 = vsel %vm1906, %v2098, 0.0
          %v2115 = vsel %vm1907, %v2099, 0.0
          %v2116 = vsel %vm1908, %v2100, 0.0
          %v2117 = vsel %vm1909, %v2101, 0.0
          %v2118 = vsel %vm1910, %v2102, 0.0
          %v2119 = vsel %vm1911, %v2103, 0.0
          %v2120 = vsel %vm1912, %v2104, 0.0
          %v2121 = vsel %vm1913, %v2105, 0.0
          %v2122 = vsel %vm1914, %v2106, 0.0
          %v2123 = vsel %vm1915, %v2107, 0.0
          %v2124 = vsel %vm1916, %v2108, 0.0
          %v2125 = vsel %vm1917, %v2109, 0.0
          %v2126 = vmul.f32 %v1568, %v2110
          %v2127 = vmul.f32 %v1569, %v2111
          %v2128 = vmul.f32 %v1570, %v2112
          %v2129 = vmul.f32 %v1571, %v2113
          %v2130 = vmul.f32 %v1572, %v2114
          %v2131 = vmul.f32 %v1573, %v2115
          %v2132 = vmul.f32 %v1574, %v2116
          %v2133 = vmul.f32 %v1575, %v2117
          %v2134 = vmul.f32 %v1576, %v2118
          %v2135 = vmul.f32 %v1577, %v2119
          %v2136 = vmul.f32 %v1578, %v2120
          %v2137 = vmul.f32 %v1579, %v2121
          %v2138 = vmul.f32 %v1580, %v2122
          %v2139 = vmul.f32 %v1581, %v2123
          %v2140 = vmul.f32 %v1582, %v2124
          %v2141 = vmul.f32 %v1583, %v2125
          %v2142 = vmul.f32 %v1668, %v2110
          %v2143 = vmul.f32 %v1669, %v2111
          %v2144 = vmul.f32 %v1670, %v2112
          %v2145 = vmul.f32 %v1671, %v2113
          %v2146 = vmul.f32 %v1672, %v2114
          %v2147 = vmul.f32 %v1673, %v2115
          %v2148 = vmul.f32 %v1674, %v2116
          %v2149 = vmul.f32 %v1675, %v2117
          %v2150 = vmul.f32 %v1676, %v2118
          %v2151 = vmul.f32 %v1677, %v2119
          %v2152 = vmul.f32 %v1678, %v2120
          %v2153 = vmul.f32 %v1679, %v2121
          %v2154 = vmul.f32 %v1680, %v2122
          %v2155 = vmul.f32 %v1681, %v2123
          %v2156 = vmul.f32 %v1682, %v2124
          %v2157 = vmul.f32 %v1683, %v2125
          %v2158 = vmul.f32 %v2126, %v1668
          %v2159 = vmul.f32 %v2127, %v1669
          %v2160 = vmul.f32 %v2128, %v1670
          %v2161 = vmul.f32 %v2129, %v1671
          %v2162 = vmul.f32 %v2130, %v1672
          %v2163 = vmul.f32 %v2131, %v1673
          %v2164 = vmul.f32 %v2132, %v1674
          %v2165 = vmul.f32 %v2133, %v1675
          %v2166 = vmul.f32 %v2134, %v1676
          %v2167 = vmul.f32 %v2135, %v1677
          %v2168 = vmul.f32 %v2136, %v1678
          %v2169 = vmul.f32 %v2137, %v1679
          %v2170 = vmul.f32 %v2138, %v1680
          %v2171 = vmul.f32 %v2139, %v1681
          %v2172 = vmul.f32 %v2140, %v1682
          %v2173 = vmul.f32 %v2141, %v1683
          %v2174 = vadd.f32 %v2158, %v2159
          %v2175 = vadd.f32 %v2174, %v2160
          %v2176 = vadd.f32 %v2175, %v2161
          %v2177 = vadd.f32 %v2176, %v2162
          %v2178 = vadd.f32 %v2177, %v2163
          %v2179 = vadd.f32 %v2178, %v2164
          %v2180 = vadd.f32 %v2179, %v2165
          %v2181 = vadd.f32 %v2180, %v2166
          %v2182 = vadd.f32 %v2181, %v2167
          %v2183 = vadd.f32 %v2182, %v2168
          %v2184 = vadd.f32 %v2183, %v2169
          %v2185 = vadd.f32 %v2184, %v2170
          %v2186 = vadd.f32 %v2185, %v2171
          %v2187 = vadd.f32 %v2186, %v2172
          %v2188 = vadd.f32 %v2187, %v2173
          %v2189 = vrot.slane %v2188, 4
          %v2190 = vadd.f32 %v2188, %v2189
          %v2191 = vrot.slane %v2190, 2
          %v2192 = vadd.f32 %v2190, %v2191
          %v2193 = vrot.slane %v2192, 1
          %v2194 = vadd.f32 %v2192, %v2193
          %v2195 = vmul.f32 %v2126, %v1768
          %v2196 = vmul.f32 %v2127, %v1769
          %v2197 = vmul.f32 %v2128, %v1770
          %v2198 = vmul.f32 %v2129, %v1771
          %v2199 = vmul.f32 %v2130, %v1772
          %v2200 = vmul.f32 %v2131, %v1773
          %v2201 = vmul.f32 %v2132, %v1774
          %v2202 = vmul.f32 %v2133, %v1775
          %v2203 = vmul.f32 %v2134, %v1776
          %v2204 = vmul.f32 %v2135, %v1777
          %v2205 = vmul.f32 %v2136, %v1778
          %v2206 = vmul.f32 %v2137, %v1779
          %v2207 = vmul.f32 %v2138, %v1780
          %v2208 = vmul.f32 %v2139, %v1781
          %v2209 = vmul.f32 %v2140, %v1782
          %v2210 = vmul.f32 %v2141, %v1783
          %v2211 = vadd.f32 %v2195, %v2196
          %v2212 = vadd.f32 %v2211, %v2197
          %v2213 = vadd.f32 %v2212, %v2198
          %v2214 = vadd.f32 %v2213, %v2199
          %v2215 = vadd.f32 %v2214, %v2200
          %v2216 = vadd.f32 %v2215, %v2201
          %v2217 = vadd.f32 %v2216, %v2202
          %v2218 = vadd.f32 %v2217, %v2203
          %v2219 = vadd.f32 %v2218, %v2204
          %v2220 = vadd.f32 %v2219, %v2205
          %v2221 = vadd.f32 %v2220, %v2206
          %v2222 = vadd.f32 %v2221, %v2207
          %v2223 = vadd.f32 %v2222, %v2208
          %v2224 = vadd.f32 %v2223, %v2209
          %v2225 = vadd.f32 %v2224, %v2210
          %v2226 = vrot.slane %v2225, 4
          %v2227 = vadd.f32 %v2225, %v2226
          %v2228 = vrot.slane %v2227, 2
          %v2229 = vadd.f32 %v2227, %v2228
          %v2230 = vrot.slane %v2229, 1
          %v2231 = vadd.f32 %v2229, %v2230
          %v2232 = vmul.f32 %v2142, %v1768
          %v2233 = vmul.f32 %v2143, %v1769
          %v2234 = vmul.f32 %v2144, %v1770
          %v2235 = vmul.f32 %v2145, %v1771
          %v2236 = vmul.f32 %v2146, %v1772
          %v2237 = vmul.f32 %v2147, %v1773
          %v2238 = vmul.f32 %v2148, %v1774
          %v2239 = vmul.f32 %v2149, %v1775
          %v2240 = vmul.f32 %v2150, %v1776
          %v2241 = vmul.f32 %v2151, %v1777
          %v2242 = vmul.f32 %v2152, %v1778
          %v2243 = vmul.f32 %v2153, %v1779
          %v2244 = vmul.f32 %v2154, %v1780
          %v2245 = vmul.f32 %v2155, %v1781
          %v2246 = vmul.f32 %v2156, %v1782
          %v2247 = vmul.f32 %v2157, %v1783
          %v2248 = vadd.f32 %v2232, %v2233
          %v2249 = vadd.f32 %v2248, %v2234
          %v2250 = vadd.f32 %v2249, %v2235
          %v2251 = vadd.f32 %v2250, %v2236
          %v2252 = vadd.f32 %v2251, %v2237
          %v2253 = vadd.f32 %v2252, %v2238
          %v2254 = vadd.f32 %v2253, %v2239
          %v2255 = vadd.f32 %v2254, %v2240
          %v2256 = vadd.f32 %v2255, %v2241
          %v2257 = vadd.f32 %v2256, %v2242
          %v2258 = vadd.f32 %v2257, %v2243
          %v2259 = vadd.f32 %v2258, %v2244
          %v2260 = vadd.f32 %v2259, %v2245
          %v2261 = vadd.f32 %v2260, %v2246
          %v2262 = vadd.f32 %v2261, %v2247
          %v2263 = vrot.slane %v2262, 4
          %v2264 = vadd.f32 %v2262, %v2263
          %v2265 = vrot.slane %v2264, 2
          %v2266 = vadd.f32 %v2264, %v2265
          %v2267 = vrot.slane %v2266, 1
          %v2268 = vadd.f32 %v2266, %v2267
          %v2269 = vadd.f32 %v1474, %v2194
          %v2270 = vadd.f32 %v1475, %v2231
          %v2271 = vadd.f32 %v1476, %v2268
        $region53: #{tpu_custom_call.1} parent=43 // loop_footer
          %s1471 = sadd.s32 %s1469, 1
        $region54: #{tpu_custom_call.1} parent=43 // loop_footer_branch
          %1468 = sbr.rel target = $region50
        $region55: #{tpu_custom_call.1} parent=43 // loop_exit
          _
        %v2272 = vsel %vm336, %v1474, 0.0
        %2273 = vadd.xlane.f32.xlu0 %v2272
        %v2274 = vpop.xlane.xlu0 %2273
        %v2275 = vrot.slane %v2274, 4
        %v2276 = vadd.f32 %v2274, %v2275
        %v2277 = vrot.slane %v2276, 2
        %v2278 = vadd.f32 %v2276, %v2277
        %v2279 = vrot.slane %v2278, 1
        %v2280 = vadd.f32 %v2278, %v2279
        %s2281 = vtos %v2280
        %s2282 = smul.f32 %s2281, %s386
        %s2283 = sadd.f32 %s348, %s2282
        %v2284 = vsel %vm336, %v1475, 0.0
        %2285 = vadd.xlane.f32.xlu0 %v2284
        %v2286 = vpop.xlane.xlu0 %2285
        %v2287 = vrot.slane %v2286, 4
        %v2288 = vadd.f32 %v2286, %v2287
        %v2289 = vrot.slane %v2288, 2
        %v2290 = vadd.f32 %v2288, %v2289
        %v2291 = vrot.slane %v2290, 1
        %v2292 = vadd.f32 %v2290, %v2291
        %s2293 = vtos %v2292
        %s2294 = smul.f32 %s2293, %s386
        %s2295 = sadd.f32 %s362, %s2294
        %v2296 = vsel %vm336, %v1476, 0.0
        %2297 = vadd.xlane.f32.xlu0 %v2296
        %v2298 = vpop.xlane.xlu0 %2297
        %v2299 = vrot.slane %v2298, 4
        %v2300 = vadd.f32 %v2298, %v2299
        %v2301 = vrot.slane %v2300, 2
        %v2302 = vadd.f32 %v2300, %v2301
        %v2303 = vrot.slane %v2302, 1
        %v2304 = vadd.f32 %v2302, %v2303
        %s2305 = vtos %v2304
        %s2306 = smul.f32 %s2305, %s386
        %s2307 = sadd.f32 %s376, %s2306
        %vm2308 = vcmp.eq.s32.totalorder %v1081, 0
        %v2309 = vstv %s2283
        %v2310 = vsel %vm2308, %v2309, 0.0
        %vm2311 = vcmp.eq.s32.totalorder %v1081, 1
        %v2312 = vstv %s2295
        %v2313 = vsel %vm2311, %v2312, 0.0
        %v2314 = vadd.f32 %v2310, %v2313
        %vm2315 = vcmp.eq.s32.totalorder %v1081, 2
        %v2316 = vstv %s2307
        %v2317 = vsel %vm2315, %v2316, 0.0
        %v2318 = vadd.f32 %v2314, %v2317
        %2319 = vst [vmem:[%s308] sm:$0x1] %v2318
        %s2320 = sand.u32 %s186, 1
        %s2321 = scalar_lea.sflag [#allocation3], %s2320
        %s2322 = sand.u32 %s186, 1
        %s2323 = scalar_lea.vmem [#allocation5], %s2322
        // Predicated region
        $region56: #{tpu_custom_call.1} parent=43 // pred_check
          %p2324 = pneg %p196
        $region57: #{tpu_custom_call.1} parent=43 // pred_check_branch
          %2326 = sbr.rel (%p2324) target = $region59
        $region58: #{tpu_custom_call.1} parent=43 // pred_region
          %s2328 = ssub.s32 16, 16
          %2329 = vsyncadd %s2321, %s2328
          %s2330 = sadd.s32 %s26, %s25
          %s2331 = smul.addr %s2330, 16
          %s2332 = scalar_lea.hbm %s6, %s2331
          %s2334 = sshll.u32 %s2323, 4
          %s2335 = int_to_ptr.vmem [resolvable:$true] %s2334
          %2337 = dma.vmem_to_hbm [thread:$0]  %s2335, 16, %s2332, %s2321
        $region59: #{tpu_custom_call.1} parent=43 // pred_fallthru
          _
      $region44: #{tpu_custom_call.1} parent=5 // pred_fallthru
        _
      %p2338 = scmp.le.s32.totalorder 2, %s16
      // Predicated region
      $region60: #{tpu_custom_call.1} parent=5 // pred_check
        %p2339 = pneg %p2338
      $region61: #{tpu_custom_call.1} parent=5 // pred_check_branch
        %2341 = sbr.rel (%p2339) target = $region63
      $region62: #{tpu_custom_call.1} parent=5 // pred_region
        %s2342 = ssub.s32 %s16, 2
        // Predicated region
        $region64: #{tpu_custom_call.1} parent=62 // pred_check
          %p2343 = pneg %p202
        $region65: #{tpu_custom_call.1} parent=62 // pred_check_branch
          %2345 = sbr.rel (%p2343) target = $region67
        $region66: #{tpu_custom_call.1} parent=62 // pred_region
          %s2346 = sand.u32 %s187, 1
          %s2347 = scalar_lea.sflag [#allocation3], %s2346
          %s2348 = sand.u32 %s187, 1
          %s2349 = scalar_lea.vmem [#allocation5], %s2348
          %2350 = dma.done %s2347, 16
        $region67: #{tpu_custom_call.1} parent=62 // pred_fallthru
          _
      $region63: #{tpu_custom_call.1} parent=5 // pred_fallthru
        _
    $region6: #{tpu_custom_call.1} parent=1 // loop_footer
      %s20 = sadd.s32 1, %s16
    $region7: #{tpu_custom_call.1} parent=1 // loop_footer_branch
      %15 = sbr.rel target = $region3
    $region8: #{tpu_custom_call.1} parent=1 // loop_exit
      _
    %2351 = vsyncpa [#allocation3], 1
    %s2352 = scalar_lea.sflag [#allocation3], 1
    %2353 = vsyncpa %s2352, 1
    %2354 = vsyncpa [#allocation4], 1
    %s2355 = scalar_lea.sflag [#allocation4], 1
    %2356 = vsyncpa %s2355, 1

</llo_original>
